<compile_context>
chip_gen: v7x
topology: tpu7x:2x2x1
jax: 0.10.0
libtpu: 0.0.40
codegen_flags: <defaults>
</compile_context>

<pallas_src>
import functools
import math

import jax
import jax.numpy as jnp
from jax.experimental import pallas as pl
from jax.experimental.pallas import tpu as pltpu

BN_EPS = 1e-5
VMEM_LIMIT = 32 * 1024 * 1024


# ------------------------------------------------------------------ Pallas kernel

def _gemm_bn_act_kernel(x_ref, w_ref, shift_ref, *rest, relu, has_res):
    # grid = (N//tn [parallel], K//tk [arbitrary])
    # y = relu?( (x @ w) + shift (+ residual) ); BN scale is pre-folded into w.
    if has_res:
        res_ref, o_ref, acc_ref = rest
    else:
        o_ref, acc_ref = rest
        res_ref = None

    k = pl.program_id(1)

    @pl.when(k == 0)
    def _():
        acc_ref[...] = jnp.zeros_like(acc_ref)

    acc_ref[...] += jnp.dot(x_ref[...], w_ref[...],
                            preferred_element_type=jnp.float32)

    @pl.when(k == pl.num_programs(1) - 1)
    def _():
        y = acc_ref[...] + shift_ref[...]
        if has_res:
            y = y + res_ref[...]
        if relu:
            y = jnp.maximum(y, 0.0)
        o_ref[...] = y


# ------------------------------------------------------------------ Pallas wrapper

def _pick_tk(K):
    # Single block for small K; otherwise a multiple-of-128 tile dividing K.
    if K <= 1536:
        return K
    for tk in (1152, 1024, 896, 768, 640, 512, 384, 256, 128):
        if K % tk == 0:
            return tk
    return K


def _pick_tn(N):
    if N <= 256:
        return N
    for tn in (256, 128):
        if N % tn == 0:
            return tn
    return N


def matmul_bn_act(x, w_bf16, shift, residual=None, relu=False):
    """relu?( x @ w + shift (+ residual) ); bf16 operands, f32 accumulation."""
    M, K = x.shape
    K2, N = w_bf16.shape
    assert K == K2
    tk = _pick_tk(K)
    tn = _pick_tn(N)
    grid = (N // tn, K // tk)

    x_bf = x.astype(jnp.bfloat16)
    shift2 = shift.reshape(1, N).astype(jnp.float32)

    in_specs = [
        pl.BlockSpec((M, tk), lambda j, k: (0, k)),
        pl.BlockSpec((tk, tn), lambda j, k: (k, j)),
        pl.BlockSpec((1, tn), lambda j, k: (0, j)),
    ]
    args = [x_bf, w_bf16, shift2]
    has_res = residual is not None
    if has_res:
        in_specs.append(pl.BlockSpec((M, tn), lambda j, k: (0, j)))
        args.append(residual.reshape(M, N).astype(jnp.float32))

    return pl.pallas_call(
        functools.partial(_gemm_bn_act_kernel, relu=relu, has_res=has_res),
        grid=grid,
        in_specs=in_specs,
        out_specs=pl.BlockSpec((M, tn), lambda j, k: (0, j)),
        out_shape=jax.ShapeDtypeStruct((M, N), jnp.float32),
        scratch_shapes=[pltpu.VMEM((M, tn), jnp.float32)],
        compiler_params=pltpu.CompilerParams(
            dimension_semantics=("parallel", "arbitrary"),
            vmem_limit_bytes=VMEM_LIMIT),
    )(*args)


# ------------------------------------------------------------------ conv glue

def im2col_3x3(x, stride):
    # NHWC input, padding=1, 3x3 kernel.
    N, H, W, C = x.shape
    xp = jnp.pad(x, ((0, 0), (1, 1), (1, 1), (0, 0)))
    Ho = (H + 2 - 3) // stride + 1
    Wo = (W + 2 - 3) // stride + 1
    cols = []
    for kh in range(3):
        for kw in range(3):
            cols.append(xp[:, kh:kh + stride * (Ho - 1) + 1:stride,
                           kw:kw + stride * (Wo - 1) + 1:stride, :])
    patches = jnp.concatenate(cols, axis=-1).reshape(N * Ho * Wo, 9 * C)
    return patches, Ho, Wo


def conv3x3(x, pk, stride, relu, residual=None):
    # pk: {"w": [9*Cin, Cout] bf16 with BN scale folded, "shift": [Cout] f32}
    N = x.shape[0]
    patches, Ho, Wo = im2col_3x3(x, stride)
    Cout = pk["w"].shape[1]
    res = None if residual is None else residual.reshape(N * Ho * Wo, Cout)
    out = matmul_bn_act(patches, pk["w"], pk["shift"], residual=res, relu=relu)
    return out.reshape(N, Ho, Wo, Cout)


def conv1x1(x, pk, stride):
    N, H, W, C = x.shape
    xs = x[:, ::stride, ::stride, :]
    Ho, Wo = xs.shape[1], xs.shape[2]
    Cout = pk["w"].shape[1]
    out = matmul_bn_act(xs.reshape(N * Ho * Wo, C), pk["w"], pk["shift"])
    return out.reshape(N, Ho, Wo, Cout)


# ------------------------------------------------------------------ parameter init / fold

def kaiming_conv(key, cout, cin, kh, kw):
    fan_out = cout * kh * kw
    std = math.sqrt(2.0 / fan_out)
    return jax.random.normal(key, (cout, cin, kh, kw), jnp.float32) * std


def bn_params(c):
    # PyTorch BatchNorm2d defaults (eval-mode running stats).
    return dict(gamma=jnp.ones((c,), jnp.float32),
                beta=jnp.zeros((c,), jnp.float32),
                mean=jnp.zeros((c,), jnp.float32),
                var=jnp.ones((c,), jnp.float32))


def init_basic_block(key, in_planes, planes, stride):
    k1, k2, k3 = jax.random.split(key, 3)
    params = {
        "conv1": kaiming_conv(k1, planes, in_planes, 3, 3),
        "bn1": bn_params(planes),
        "conv2": kaiming_conv(k2, planes, planes, 3, 3),
        "bn2": bn_params(planes),
    }
    if stride != 1 or in_planes != planes:   # BasicBlock.expansion == 1
        params["sc_conv"] = kaiming_conv(k3, planes, in_planes, 1, 1)
        params["sc_bn"] = bn_params(planes)
    return params


def _fold_conv(w, bn):
    # [Cout,Cin,kh,kw] -> [kh*kw*Cin, Cout], eval-mode BN scale folded into columns.
    cout, cin, kh, kw = w.shape
    scale = bn["gamma"] / jnp.sqrt(bn["var"] + BN_EPS)
    shift = bn["beta"] - bn["mean"] * scale
    w2 = jnp.transpose(w, (2, 3, 1, 0)).reshape(kh * kw * cin, cout)
    w2 = (w2 * scale[None, :]).astype(jnp.bfloat16)
    return dict(w=w2, shift=shift.astype(jnp.float32))


def fold_basic_block(params):
    fp = {"conv1": _fold_conv(params["conv1"], params["bn1"]),
          "conv2": _fold_conv(params["conv2"], params["bn2"])}
    if "sc_conv" in params:
        fp["sc"] = _fold_conv(params["sc_conv"], params["sc_bn"])
    return fp


# ------------------------------------------------------------------ forward

def basic_block_forward(fp, x_nchw, *, stride, is_last=False):
    """Matches BasicBlock.forward: relu(bn1(conv1(x))) -> bn2(conv2(.)) + shortcut(x);
    returns relu(out) (and preact too when is_last)."""
    x = jnp.transpose(x_nchw, (0, 2, 3, 1)).astype(jnp.float32)  # NCHW -> NHWC
    out = conv3x3(x, fp["conv1"], stride, relu=True)
    if "sc" in fp:
        sc = conv1x1(x, fp["sc"], stride)
    else:
        sc = x
    if is_last:
        # Need the pre-activation too: fuse residual add only, ReLU outside.
        preact = conv3x3(out, fp["conv2"], 1, relu=False, residual=sc)
        out = jnp.maximum(preact, 0.0)
        return (jnp.transpose(out, (0, 3, 1, 2)),
                jnp.transpose(preact, (0, 3, 1, 2)))
    # Residual add + final ReLU fused into conv2's GEMM epilogue.
    out = conv3x3(out, fp["conv2"], 1, relu=True, residual=sc)
    return jnp.transpose(out, (0, 3, 1, 2))                      # NHWC -> NCHW


if __name__ == "__main__":
    key = jax.random.PRNGKey(0)
    kp, kx = jax.random.split(key)

    # Small, TPU-friendly BasicBlock: in_planes=64 -> planes=128, stride=2, 16x16 input.
    in_planes, planes, stride = 64, 128, 2
    raw = init_basic_block(kp, in_planes, planes, stride)
    fparams = fold_basic_block(raw)

    x = jax.random.normal(kx, (2, in_planes, 16, 16), jnp.float32)  # NCHW like PyTorch

    fwd = jax.jit(functools.partial(basic_block_forward, stride=stride, is_last=False))
    out = jax.block_until_ready(fwd(fparams, x))

    assert out.shape == (2, planes, 8, 8), out.shape
    assert bool(jnp.all(jnp.isfinite(out)))
    assert bool(jnp.all(out >= 0.0))          # final ReLU applied
    print("KERNEL_OK")
</pallas_src>

<mosaic_0001>
module attributes {stable_mosaic.version = 11 : i64} {
  func.func @_gemm_bn_act_kernel(%arg0: i32, %arg1: i32, %arg2: memref<128x576xbf16, #tpu.memory_space<vmem>>, %arg3: memref<576x128xbf16, #tpu.memory_space<vmem>>, %arg4: memref<1x128xf32, #tpu.memory_space<vmem>>, %arg5: memref<128x128xf32, #tpu.memory_space<vmem>>, %arg6: memref<128x128xf32, #tpu.memory_space<vmem>>) attributes {dimension_semantics = [#tpu.dimension_semantics<parallel>, #tpu.dimension_semantics<arbitrary>], iteration_bounds = array<i64: 1, 1>, scalar_prefetch = 0 : i64, scratch_operands = 1 : i64, tpu.core_type = #tpu.core_type<tc>, window_params = [{transform_indices = @transform_0, window_bounds = array<i64: 128, 576>}, {transform_indices = @transform_1, window_bounds = array<i64: 576, 128>}, {transform_indices = @transform_2, window_bounds = array<i64: 1, 128>}, {transform_indices = @transform_3, window_bounds = array<i64: 128, 128>}]} {
    %c0_i32 = arith.constant 0 : i32
    %0 = arith.cmpi eq, %arg1, %c0_i32 : i32
    %1 = arith.extui %0 : i1 to i32
    %c0_i32_0 = arith.constant 0 : i32
    %2 = arith.cmpi ne, %1, %c0_i32_0 : i32
    scf.if %2 {
      %cst_10 = arith.constant 0.000000e+00 : f32
      %12 = vector.broadcast %cst_10 : f32 to vector<128x128xf32>
      %c0_11 = arith.constant 0 : index
      %c0_12 = arith.constant 0 : index
      %13 = vector.load %arg6[%c0_11, %c0_12] : memref<128x128xf32, #tpu.memory_space<vmem>>, vector<128x128xf32>
      tpu.vector_store %arg6[%c0_11, %c0_12], %12 {strides = array<i32>} : memref<128x128xf32, #tpu.memory_space<vmem>>, vector<128x128xf32>,
    } else {
    }
    %c0 = arith.constant 0 : index
    %c0_1 = arith.constant 0 : index
    %3 = vector.load %arg6[%c0, %c0_1] : memref<128x128xf32, #tpu.memory_space<vmem>>, vector<128x128xf32>
    %c0_2 = arith.constant 0 : index
    %c0_3 = arith.constant 0 : index
    %4 = vector.load %arg2[%c0_2, %c0_3] : memref<128x576xbf16, #tpu.memory_space<vmem>>, vector<128x576xbf16>
    %c0_4 = arith.constant 0 : index
    %c0_5 = arith.constant 0 : index
    %5 = vector.load %arg3[%c0_4, %c0_5] : memref<576x128xbf16, #tpu.memory_space<vmem>>, vector<576x128xbf16>
    %cst = arith.constant dense<0.000000e+00> : vector<128x128xf32>
    %6 = tpu.matmul %4, %5, %cst {dimension_numbers = #tpu.dot_dimension_numbers<[1], [0], [0], [1], [0, 0, 1, 1], [], []>} : vector<128x576xbf16>, vector<576x128xbf16>, vector<128x128xf32> -> vector<128x128xf32>
    %7 = arith.addf %3, %6 : vector<128x128xf32>
    %c0_6 = arith.constant 0 : index
    %c0_7 = arith.constant 0 : index
    %8 = vector.load %arg6[%c0_6, %c0_7] : memref<128x128xf32, #tpu.memory_space<vmem>>, vector<128x128xf32>
    tpu.vector_store %arg6[%c0_6, %c0_7], %7 {strides = array<i32>} : memref<128x128xf32, #tpu.memory_space<vmem>>, vector<128x128xf32>,
    %c0_i32_8 = arith.constant 0 : i32
    %9 = arith.cmpi eq, %arg1, %c0_i32_8 : i32
    %10 = arith.extui %9 : i1 to i32
    %c0_i32_9 = arith.constant 0 : i32
    %11 = arith.cmpi ne, %10, %c0_i32_9 : i32
    scf.if %11 {
      %c0_10 = arith.constant 0 : index
      %c0_11 = arith.constant 0 : index
      %12 = vector.load %arg6[%c0_10, %c0_11] : memref<128x128xf32, #tpu.memory_space<vmem>>, vector<128x128xf32>
      %c0_12 = arith.constant 0 : index
      %c0_13 = arith.constant 0 : index
      %13 = vector.load %arg4[%c0_12, %c0_13] : memref<1x128xf32, #tpu.memory_space<vmem>>, vector<1x128xf32>
      %14 = vector.broadcast %13 : vector<1x128xf32> to vector<128x128xf32>
      %15 = arith.addf %12, %14 : vector<128x128xf32>
      %cst_14 = arith.constant 0.000000e+00 : f32
      %16 = vector.broadcast %cst_14 : f32 to vector<128x128xf32>
      %17 = arith.maximumf %15, %16 : vector<128x128xf32>
      %c0_15 = arith.constant 0 : index
      %c0_16 = arith.constant 0 : index
      %18 = vector.load %arg5[%c0_15, %c0_16] : memref<128x128xf32, #tpu.memory_space<vmem>>, vector<128x128xf32>
      tpu.vector_store %arg5[%c0_15, %c0_16], %17 {strides = array<i32>} : memref<128x128xf32, #tpu.memory_space<vmem>>, vector<128x128xf32>,
    } else {
    }
    return
  }
  func.func @transform_0(%arg0: i32, %arg1: i32) -> (i32, i32) {
    %c0_i32 = arith.constant 0 : i32
    %c0_i32_0 = arith.constant 0 : i32
    return %c0_i32, %arg1 : i32, i32
  }
  func.func @transform_1(%arg0: i32, %arg1: i32) -> (i32, i32) {
    %c0_i32 = arith.constant 0 : i32
    return %arg1, %arg0 : i32, i32
  }
  func.func @transform_2(%arg0: i32, %arg1: i32) -> (i32, i32) {
    %c0_i32 = arith.constant 0 : i32
    %c0_i32_0 = arith.constant 0 : i32
    return %c0_i32, %arg0 : i32, i32
  }
  func.func @transform_3(%arg0: i32, %arg1: i32) -> (i32, i32) {
    %c0_i32 = arith.constant 0 : i32
    %c0_i32_0 = arith.constant 0 : i32
    return %c0_i32, %arg0 : i32, i32
  }
}

module attributes {stable_mosaic.version = 11 : i64} {
  func.func @_gemm_bn_act_kernel(%arg0: i32, %arg1: i32, %arg2: memref<128x64xbf16, #tpu.memory_space<vmem>>, %arg3: memref<64x128xbf16, #tpu.memory_space<vmem>>, %arg4: memref<1x128xf32, #tpu.memory_space<vmem>>, %arg5: memref<128x128xf32, #tpu.memory_space<vmem>>, %arg6: memref<128x128xf32, #tpu.memory_space<vmem>>) attributes {dimension_semantics = [#tpu.dimension_semantics<parallel>, #tpu.dimension_semantics<arbitrary>], iteration_bounds = array<i64: 1, 1>, scalar_prefetch = 0 : i64, scratch_operands = 1 : i64, tpu.core_type = #tpu.core_type<tc>, window_params = [{transform_indices = @transform_0, window_bounds = array<i64: 128, 64>}, {transform_indices = @transform_1, window_bounds = array<i64: 64, 128>}, {transform_indices = @transform_2, window_bounds = array<i64: 1, 128>}, {transform_indices = @transform_3, window_bounds = array<i64: 128, 128>}]} {
    %c0_i32 = arith.constant 0 : i32
    %0 = arith.cmpi eq, %arg1, %c0_i32 : i32
    %1 = arith.extui %0 : i1 to i32
    %c0_i32_0 = arith.constant 0 : i32
    %2 = arith.cmpi ne, %1, %c0_i32_0 : i32
    scf.if %2 {
      %cst_10 = arith.constant 0.000000e+00 : f32
      %12 = vector.broadcast %cst_10 : f32 to vector<128x128xf32>
      %c0_11 = arith.constant 0 : index
      %c0_12 = arith.constant 0 : index
      %13 = vector.load %arg6[%c0_11, %c0_12] : memref<128x128xf32, #tpu.memory_space<vmem>>, vector<128x128xf32>
      tpu.vector_store %arg6[%c0_11, %c0_12], %12 {strides = array<i32>} : memref<128x128xf32, #tpu.memory_space<vmem>>, vector<128x128xf32>,
    } else {
    }
    %c0 = arith.constant 0 : index
    %c0_1 = arith.constant 0 : index
    %3 = vector.load %arg6[%c0, %c0_1] : memref<128x128xf32, #tpu.memory_space<vmem>>, vector<128x128xf32>
    %c0_2 = arith.constant 0 : index
    %c0_3 = arith.constant 0 : index
    %4 = vector.load %arg2[%c0_2, %c0_3] : memref<128x64xbf16, #tpu.memory_space<vmem>>, vector<128x64xbf16>
    %c0_4 = arith.constant 0 : index
    %c0_5 = arith.constant 0 : index
    %5 = vector.load %arg3[%c0_4, %c0_5] : memref<64x128xbf16, #tpu.memory_space<vmem>>, vector<64x128xbf16>
    %cst = arith.constant dense<0.000000e+00> : vector<128x128xf32>
    %6 = tpu.matmul %4, %5, %cst {dimension_numbers = #tpu.dot_dimension_numbers<[1], [0], [0], [1], [0, 0, 1, 1], [], []>} : vector<128x64xbf16>, vector<64x128xbf16>, vector<128x128xf32> -> vector<128x128xf32>
    %7 = arith.addf %3, %6 : vector<128x128xf32>
    %c0_6 = arith.constant 0 : index
    %c0_7 = arith.constant 0 : index
    %8 = vector.load %arg6[%c0_6, %c0_7] : memref<128x128xf32, #tpu.memory_space<vmem>>, vector<128x128xf32>
    tpu.vector_store %arg6[%c0_6, %c0_7], %7 {strides = array<i32>} : memref<128x128xf32, #tpu.memory_space<vmem>>, vector<128x128xf32>,
    %c0_i32_8 = arith.constant 0 : i32
    %9 = arith.cmpi eq, %arg1, %c0_i32_8 : i32
    %10 = arith.extui %9 : i1 to i32
    %c0_i32_9 = arith.constant 0 : i32
    %11 = arith.cmpi ne, %10, %c0_i32_9 : i32
    scf.if %11 {
      %c0_10 = arith.constant 0 : index
      %c0_11 = arith.constant 0 : index
      %12 = vector.load %arg6[%c0_10, %c0_11] : memref<128x128xf32, #tpu.memory_space<vmem>>, vector<128x128xf32>
      %c0_12 = arith.constant 0 : index
      %c0_13 = arith.constant 0 : index
      %13 = vector.load %arg4[%c0_12, %c0_13] : memref<1x128xf32, #tpu.memory_space<vmem>>, vector<1x128xf32>
      %14 = vector.broadcast %13 : vector<1x128xf32> to vector<128x128xf32>
      %15 = arith.addf %12, %14 : vector<128x128xf32>
      %c0_14 = arith.constant 0 : index
      %c0_15 = arith.constant 0 : index
      %16 = vector.load %arg5[%c0_14, %c0_15] : memref<128x128xf32, #tpu.memory_space<vmem>>, vector<128x128xf32>
      tpu.vector_store %arg5[%c0_14, %c0_15], %15 {strides = array<i32>} : memref<128x128xf32, #tpu.memory_space<vmem>>, vector<128x128xf32>,
    } else {
    }
    return
  }
  func.func @transform_0(%arg0: i32, %arg1: i32) -> (i32, i32) {
    %c0_i32 = arith.constant 0 : i32
    %c0_i32_0 = arith.constant 0 : i32
    return %c0_i32, %arg1 : i32, i32
  }
  func.func @transform_1(%arg0: i32, %arg1: i32) -> (i32, i32) {
    %c0_i32 = arith.constant 0 : i32
    return %arg1, %arg0 : i32, i32
  }
  func.func @transform_2(%arg0: i32, %arg1: i32) -> (i32, i32) {
    %c0_i32 = arith.constant 0 : i32
    %c0_i32_0 = arith.constant 0 : i32
    return %c0_i32, %arg0 : i32, i32
  }
  func.func @transform_3(%arg0: i32, %arg1: i32) -> (i32, i32) {
    %c0_i32 = arith.constant 0 : i32
    %c0_i32_0 = arith.constant 0 : i32
    return %c0_i32, %arg0 : i32, i32
  }
}

module attributes {stable_mosaic.version = 11 : i64} {
  func.func @_gemm_bn_act_kernel(%arg0: i32, %arg1: i32, %arg2: memref<128x1152xbf16, #tpu.memory_space<vmem>>, %arg3: memref<1152x128xbf16, #tpu.memory_space<vmem>>, %arg4: memref<1x128xf32, #tpu.memory_space<vmem>>, %arg5: memref<128x128xf32, #tpu.memory_space<vmem>>, %arg6: memref<128x128xf32, #tpu.memory_space<vmem>>, %arg7: memref<128x128xf32, #tpu.memory_space<vmem>>) attributes {dimension_semantics = [#tpu.dimension_semantics<parallel>, #tpu.dimension_semantics<arbitrary>], iteration_bounds = array<i64: 1, 1>, scalar_prefetch = 0 : i64, scratch_operands = 1 : i64, tpu.core_type = #tpu.core_type<tc>, window_params = [{transform_indices = @transform_0, window_bounds = array<i64: 128, 1152>}, {transform_indices = @transform_1, window_bounds = array<i64: 1152, 128>}, {transform_indices = @transform_2, window_bounds = array<i64: 1, 128>}, {transform_indices = @transform_3, window_bounds = array<i64: 128, 128>}, {transform_indices = @transform_4, window_bounds = array<i64: 128, 128>}]} {
    %c0_i32 = arith.constant 0 : i32
    %0 = arith.cmpi eq, %arg1, %c0_i32 : i32
    %1 = arith.extui %0 : i1 to i32
    %c0_i32_0 = arith.constant 0 : i32
    %2 = arith.cmpi ne, %1, %c0_i32_0 : i32
    scf.if %2 {
      %cst_10 = arith.constant 0.000000e+00 : f32
      %12 = vector.broadcast %cst_10 : f32 to vector<128x128xf32>
      %c0_11 = arith.constant 0 : index
      %c0_12 = arith.constant 0 : index
      %13 = vector.load %arg7[%c0_11, %c0_12] : memref<128x128xf32, #tpu.memory_space<vmem>>, vector<128x128xf32>
      tpu.vector_store %arg7[%c0_11, %c0_12], %12 {strides = array<i32>} : memref<128x128xf32, #tpu.memory_space<vmem>>, vector<128x128xf32>,
    } else {
    }
    %c0 = arith.constant 0 : index
    %c0_1 = arith.constant 0 : index
    %3 = vector.load %arg7[%c0, %c0_1] : memref<128x128xf32, #tpu.memory_space<vmem>>, vector<128x128xf32>
    %c0_2 = arith.constant 0 : index
    %c0_3 = arith.constant 0 : index
    %4 = vector.load %arg2[%c0_2, %c0_3] : memref<128x1152xbf16, #tpu.memory_space<vmem>>, vector<128x1152xbf16>
    %c0_4 = arith.constant 0 : index
    %c0_5 = arith.constant 0 : index
    %5 = vector.load %arg3[%c0_4, %c0_5] : memref<1152x128xbf16, #tpu.memory_space<vmem>>, vector<1152x128xbf16>
    %cst = arith.constant dense<0.000000e+00> : vector<128x128xf32>
    %6 = tpu.matmul %4, %5, %cst {dimension_numbers = #tpu.dot_dimension_numbers<[1], [0], [0], [1], [0, 0, 1, 1], [], []>} : vector<128x1152xbf16>, vector<1152x128xbf16>, vector<128x128xf32> -> vector<128x128xf32>
    %7 = arith.addf %3, %6 : vector<128x128xf32>
    %c0_6 = arith.constant 0 : index
    %c0_7 = arith.constant 0 : index
    %8 = vector.load %arg7[%c0_6, %c0_7] : memref<128x128xf32, #tpu.memory_space<vmem>>, vector<128x128xf32>
    tpu.vector_store %arg7[%c0_6, %c0_7], %7 {strides = array<i32>} : memref<128x128xf32, #tpu.memory_space<vmem>>, vector<128x128xf32>,
    %c0_i32_8 = arith.constant 0 : i32
    %9 = arith.cmpi eq, %arg1, %c0_i32_8 : i32
    %10 = arith.extui %9 : i1 to i32
    %c0_i32_9 = arith.constant 0 : i32
    %11 = arith.cmpi ne, %10, %c0_i32_9 : i32
    scf.if %11 {
      %c0_10 = arith.constant 0 : index
      %c0_11 = arith.constant 0 : index
      %12 = vector.load %arg7[%c0_10, %c0_11] : memref<128x128xf32, #tpu.memory_space<vmem>>, vector<128x128xf32>
      %c0_12 = arith.constant 0 : index
      %c0_13 = arith.constant 0 : index
      %13 = vector.load %arg4[%c0_12, %c0_13] : memref<1x128xf32, #tpu.memory_space<vmem>>, vector<1x128xf32>
      %14 = vector.broadcast %13 : vector<1x128xf32> to vector<128x128xf32>
      %15 = arith.addf %12, %14 : vector<128x128xf32>
      %c0_14 = arith.constant 0 : index
      %c0_15 = arith.constant 0 : index
      %16 = vector.load %arg5[%c0_14, %c0_15] : memref<128x128xf32, #tpu.memory_space<vmem>>, vector<128x128xf32>
      %17 = arith.addf %15, %16 : vector<128x128xf32>
      %cst_16 = arith.constant 0.000000e+00 : f32
      %18 = vector.broadcast %cst_16 : f32 to vector<128x128xf32>
      %19 = arith.maximumf %17, %18 : vector<128x128xf32>
      %c0_17 = arith.constant 0 : index
      %c0_18 = arith.constant 0 : index
      %20 = vector.load %arg6[%c0_17, %c0_18] : memref<128x128xf32, #tpu.memory_space<vmem>>, vector<128x128xf32>
      tpu.vector_store %arg6[%c0_17, %c0_18], %19 {strides = array<i32>} : memref<128x128xf32, #tpu.memory_space<vmem>>, vector<128x128xf32>,
    } else {
    }
    return
  }
  func.func @transform_0(%arg0: i32, %arg1: i32) -> (i32, i32) {
    %c0_i32 = arith.constant 0 : i32
    %c0_i32_0 = arith.constant 0 : i32
    return %c0_i32, %arg1 : i32, i32
  }
  func.func @transform_1(%arg0: i32, %arg1: i32) -> (i32, i32) {
    %c0_i32 = arith.constant 0 : i32
    return %arg1, %arg0 : i32, i32
  }
  func.func @transform_2(%arg0: i32, %arg1: i32) -> (i32, i32) {
    %c0_i32 = arith.constant 0 : i32
    %c0_i32_0 = arith.constant 0 : i32
    return %c0_i32, %arg0 : i32, i32
  }
  func.func @transform_3(%arg0: i32, %arg1: i32) -> (i32, i32) {
    %c0_i32 = arith.constant 0 : i32
    %c0_i32_0 = arith.constant 0 : i32
    return %c0_i32, %arg0 : i32, i32
  }
  func.func @transform_4(%arg0: i32, %arg1: i32) -> (i32, i32) {
    %c0_i32 = arith.constant 0 : i32
    %c0_i32_0 = arith.constant 0 : i32
    return %c0_i32, %arg0 : i32, i32
  }
}

</mosaic_0001>

<llo_original>
// kernel: basic_block_forward.3
$region0: #{basic_block_forward.3}
  #allocation0 [shape = 'u32[]', space=smem, size = 0x4, offset = 0x4, fixed_abs, tag = 'smem constant byte address 0x4 - core index']
  #allocation1 [shape = 'u32[144,128]{1,0:T(1,128)}', space=vmem, size = 0x12000, scoped, tag = 'internal scratch']
  #allocation2 [shape = 'f32[128,128]{1,0:T(8,128)}', space=vmem, size = 0x10000, scoped, tag = 'scratch operand']
  %s0 = inlined_call_operand.vmem [shape: bf16[128,576], index: 0, kind: input, shape index: {}]
  %s1 = inlined_call_operand.vmem [shape: bf16[576,128], index: 1, kind: input, shape index: {}]
  %s2 = inlined_call_operand.vmem [shape: f32[1,128], index: 2, kind: input, shape index: {}]
  %s3 = inlined_call_operand.vmem [shape: f32[128,128], index: 3, kind: output, shape index: {}]
  %s4 = sld [smem:[#allocation0]]
  $region30: #{basic_block_forward.3} parent=0
    _
  %s6 = ssub.s32 1, %s4
  %s7 = scalar_select 0, %s6, %s4
  // Predicated region
  $region2: #{basic_block_forward.3} parent=0 // pred_check
    _
  $region3: #{basic_block_forward.3} parent=0 // pred_check_branch
    %9 = sbr.rel (0) target = $region5
  $region4: #{basic_block_forward.3} parent=0 // pred_region
    _
  $region5: #{basic_block_forward.3} parent=0 // pred_fallthru
    _
  // Predicated region
  $region6: #{basic_block_forward.3} parent=0 // pred_check
    _
  $region7: #{basic_block_forward.3} parent=0 // pred_check_branch
    %11 = sbr.rel (0) target = $region9
  $region8: #{basic_block_forward.3} parent=0 // pred_region
    _
  $region9: #{basic_block_forward.3} parent=0 // pred_fallthru
    _
  // Predicated region
  $region10: #{basic_block_forward.3} parent=0 // pred_check
    _
  $region11: #{basic_block_forward.3} parent=0 // pred_check_branch
    %13 = sbr.rel (0) target = $region13
  $region12: #{basic_block_forward.3} parent=0 // pred_region
    _
  $region13: #{basic_block_forward.3} parent=0 // pred_fallthru
    _
  %p15 = scmp.eq.s32.totalorder 0, 0
  // Predicated region
  $region14: #{basic_block_forward.3} parent=0 // pred_check
    %p16 = pneg %p15
  $region15: #{basic_block_forward.3} parent=0 // pred_check_branch
    %18 = sbr.rel (%p16) target = $region17
  $region16: #{basic_block_forward.3} parent=0 // pred_region
    %19 = vst [vmem:[#allocation2] sm:$0xff] 0.0
    %20 = vst [vmem:[#allocation2 + $0x8] sm:$0xff] 0.0
    %21 = vst [vmem:[#allocation2 + $0x10] sm:$0xff] 0.0
    %22 = vst [vmem:[#allocation2 + $0x18] sm:$0xff] 0.0
    %23 = vst [vmem:[#allocation2 + $0x20] sm:$0xff] 0.0
    %24 = vst [vmem:[#allocation2 + $0x28] sm:$0xff] 0.0
    %25 = vst [vmem:[#allocation2 + $0x30] sm:$0xff] 0.0
    %26 = vst [vmem:[#allocation2 + $0x38] sm:$0xff] 0.0
    %27 = vst [vmem:[#allocation2 + $0x40] sm:$0xff] 0.0
    %28 = vst [vmem:[#allocation2 + $0x48] sm:$0xff] 0.0
    %29 = vst [vmem:[#allocation2 + $0x50] sm:$0xff] 0.0
    %30 = vst [vmem:[#allocation2 + $0x58] sm:$0xff] 0.0
    %31 = vst [vmem:[#allocation2 + $0x60] sm:$0xff] 0.0
    %32 = vst [vmem:[#allocation2 + $0x68] sm:$0xff] 0.0
    %33 = vst [vmem:[#allocation2 + $0x70] sm:$0xff] 0.0
    %34 = vst [vmem:[#allocation2 + $0x78] sm:$0xff] 0.0
  $region17: #{basic_block_forward.3} parent=0 // pred_fallthru
    _
  %v35 = vld [vmem:[#allocation2] sm:$0xff]
  %v36 = vld [vmem:[#allocation2 + $0x8] sm:$0xff]
  %v37 = vld [vmem:[#allocation2 + $0x10] sm:$0xff]
  %v38 = vld [vmem:[#allocation2 + $0x18] sm:$0xff]
  %v39 = vld [vmem:[#allocation2 + $0x20] sm:$0xff]
  %v40 = vld [vmem:[#allocation2 + $0x28] sm:$0xff]
  %v41 = vld [vmem:[#allocation2 + $0x30] sm:$0xff]
  %v42 = vld [vmem:[#allocation2 + $0x38] sm:$0xff]
  %v43 = vld [vmem:[#allocation2 + $0x40] sm:$0xff]
  %v44 = vld [vmem:[#allocation2 + $0x48] sm:$0xff]
  %v45 = vld [vmem:[#allocation2 + $0x50] sm:$0xff]
  %v46 = vld [vmem:[#allocation2 + $0x58] sm:$0xff]
  %v47 = vld [vmem:[#allocation2 + $0x60] sm:$0xff]
  %v48 = vld [vmem:[#allocation2 + $0x68] sm:$0xff]
  %v49 = vld [vmem:[#allocation2 + $0x70] sm:$0xff]
  %v50 = vld [vmem:[#allocation2 + $0x78] sm:$0xff]
  %v51 = vld [vmem:[%s0] sm:$0xff]
  %v52 = vld [vmem:[%s0 + $0x8] sm:$0xff]
  %v53 = vld [vmem:[%s0 + $0x10] sm:$0xf]
  %v54 = vld [vmem:[%s0 + $0x14] sm:$0xff]
  %v55 = vld [vmem:[%s0 + $0x1c] sm:$0xff]
  %v56 = vld [vmem:[%s0 + $0x24] sm:$0xf]
  %v57 = vld [vmem:[%s0 + $0x28] sm:$0xff]
  %v58 = vld [vmem:[%s0 + $0x30] sm:$0xff]
  %v59 = vld [vmem:[%s0 + $0x38] sm:$0xf]
  %v60 = vld [vmem:[%s0 + $0x3c] sm:$0xff]
  %v61 = vld [vmem:[%s0 + $0x44] sm:$0xff]
  %v62 = vld [vmem:[%s0 + $0x4c] sm:$0xf]
  %v63 = vld [vmem:[%s0 + $0x50] sm:$0xff]
  %v64 = vld [vmem:[%s0 + $0x58] sm:$0xff]
  %v65 = vld [vmem:[%s0 + $0x60] sm:$0xf]
  %v66 = vld [vmem:[%s0 + $0x64] sm:$0xff]
  %v67 = vld [vmem:[%s0 + $0x6c] sm:$0xff]
  %v68 = vld [vmem:[%s0 + $0x74] sm:$0xf]
  %v69 = vld [vmem:[%s0 + $0x78] sm:$0xff]
  %v70 = vld [vmem:[%s0 + $0x80] sm:$0xff]
  %v71 = vld [vmem:[%s0 + $0x88] sm:$0xf]
  %v72 = vld [vmem:[%s0 + $0x8c] sm:$0xff]
  %v73 = vld [vmem:[%s0 + $0x94] sm:$0xff]
  %v74 = vld [vmem:[%s0 + $0x9c] sm:$0xf]
  %v75 = vld [vmem:[%s0 + $0xa0] sm:$0xff]
  %v76 = vld [vmem:[%s0 + $0xa8] sm:$0xff]
  %v77 = vld [vmem:[%s0 + $0xb0] sm:$0xf]
  %v78 = vld [vmem:[%s0 + $0xb4] sm:$0xff]
  %v79 = vld [vmem:[%s0 + $0xbc] sm:$0xff]
  %v80 = vld [vmem:[%s0 + $0xc4] sm:$0xf]
  %v81 = vld [vmem:[%s0 + $0xc8] sm:$0xff]
  %v82 = vld [vmem:[%s0 + $0xd0] sm:$0xff]
  %v83 = vld [vmem:[%s0 + $0xd8] sm:$0xf]
  %v84 = vld [vmem:[%s0 + $0xdc] sm:$0xff]
  %v85 = vld [vmem:[%s0 + $0xe4] sm:$0xff]
  %v86 = vld [vmem:[%s0 + $0xec] sm:$0xf]
  %v87 = vld [vmem:[%s0 + $0xf0] sm:$0xff]
  %v88 = vld [vmem:[%s0 + $0xf8] sm:$0xff]
  %v89 = vld [vmem:[%s0 + $0x100] sm:$0xf]
  %v90 = vld [vmem:[%s0 + $0x104] sm:$0xff]
  %v91 = vld [vmem:[%s0 + $0x10c] sm:$0xff]
  %v92 = vld [vmem:[%s0 + $0x114] sm:$0xf]
  %v93 = vld [vmem:[%s0 + $0x118] sm:$0xff]
  %v94 = vld [vmem:[%s0 + $0x120] sm:$0xff]
  %v95 = vld [vmem:[%s0 + $0x128] sm:$0xf]
  %v96 = vld [vmem:[%s0 + $0x12c] sm:$0xff]
  %v97 = vld [vmem:[%s0 + $0x134] sm:$0xff]
  %v98 = vld [vmem:[%s0 + $0x13c] sm:$0xf]
  %v99 = vld [vmem:[%s1] sm:$0xf]
  %v100 = vld [vmem:[%s1 + $0x4] sm:$0xf]
  %v101 = vld [vmem:[%s1 + $0x8] sm:$0xf]
  %v102 = vld [vmem:[%s1 + $0xc] sm:$0xf]
  %v103 = vld [vmem:[%s1 + $0x10] sm:$0xf]
  %v104 = vld [vmem:[%s1 + $0x14] sm:$0xf]
  %v105 = vld [vmem:[%s1 + $0x18] sm:$0xf]
  %v106 = vld [vmem:[%s1 + $0x1c] sm:$0xf]
  %v107 = vld [vmem:[%s1 + $0x20] sm:$0xf]
  %v108 = vld [vmem:[%s1 + $0x24] sm:$0xf]
  %v109 = vld [vmem:[%s1 + $0x28] sm:$0xf]
  %v110 = vld [vmem:[%s1 + $0x2c] sm:$0xf]
  %v111 = vld [vmem:[%s1 + $0x30] sm:$0xf]
  %v112 = vld [vmem:[%s1 + $0x34] sm:$0xf]
  %v113 = vld [vmem:[%s1 + $0x38] sm:$0xf]
  %v114 = vld [vmem:[%s1 + $0x3c] sm:$0xf]
  %v115 = vld [vmem:[%s1 + $0x40] sm:$0xf]
  %v116 = vld [vmem:[%s1 + $0x44] sm:$0xf]
  %v117 = vld [vmem:[%s1 + $0x48] sm:$0xf]
  %v118 = vld [vmem:[%s1 + $0x4c] sm:$0xf]
  %v119 = vld [vmem:[%s1 + $0x50] sm:$0xf]
  %v120 = vld [vmem:[%s1 + $0x54] sm:$0xf]
  %v121 = vld [vmem:[%s1 + $0x58] sm:$0xf]
  %v122 = vld [vmem:[%s1 + $0x5c] sm:$0xf]
  %v123 = vld [vmem:[%s1 + $0x60] sm:$0xf]
  %v124 = vld [vmem:[%s1 + $0x64] sm:$0xf]
  %v125 = vld [vmem:[%s1 + $0x68] sm:$0xf]
  %v126 = vld [vmem:[%s1 + $0x6c] sm:$0xf]
  %v127 = vld [vmem:[%s1 + $0x70] sm:$0xf]
  %v128 = vld [vmem:[%s1 + $0x74] sm:$0xf]
  %v129 = vld [vmem:[%s1 + $0x78] sm:$0xf]
  %v130 = vld [vmem:[%s1 + $0x7c] sm:$0xf]
  %v131 = vld [vmem:[%s1 + $0x80] sm:$0xf]
  %v132 = vld [vmem:[%s1 + $0x84] sm:$0xf]
  %v133 = vld [vmem:[%s1 + $0x88] sm:$0xf]
  %v134 = vld [vmem:[%s1 + $0x8c] sm:$0xf]
  %v135 = vld [vmem:[%s1 + $0x90] sm:$0xf]
  %v136 = vld [vmem:[%s1 + $0x94] sm:$0xf]
  %v137 = vld [vmem:[%s1 + $0x98] sm:$0xf]
  %v138 = vld [vmem:[%s1 + $0x9c] sm:$0xf]
  %v139 = vld [vmem:[%s1 + $0xa0] sm:$0xf]
  %v140 = vld [vmem:[%s1 + $0xa4] sm:$0xf]
  %v141 = vld [vmem:[%s1 + $0xa8] sm:$0xf]
  %v142 = vld [vmem:[%s1 + $0xac] sm:$0xf]
  %v143 = vld [vmem:[%s1 + $0xb0] sm:$0xf]
  %v144 = vld [vmem:[%s1 + $0xb4] sm:$0xf]
  %v145 = vld [vmem:[%s1 + $0xb8] sm:$0xf]
  %v146 = vld [vmem:[%s1 + $0xbc] sm:$0xf]
  %v147 = vld [vmem:[%s1 + $0xc0] sm:$0xf]
  %v148 = vld [vmem:[%s1 + $0xc4] sm:$0xf]
  %v149 = vld [vmem:[%s1 + $0xc8] sm:$0xf]
  %v150 = vld [vmem:[%s1 + $0xcc] sm:$0xf]
  %v151 = vld [vmem:[%s1 + $0xd0] sm:$0xf]
  %v152 = vld [vmem:[%s1 + $0xd4] sm:$0xf]
  %v153 = vld [vmem:[%s1 + $0xd8] sm:$0xf]
  %v154 = vld [vmem:[%s1 + $0xdc] sm:$0xf]
  %v155 = vld [vmem:[%s1 + $0xe0] sm:$0xf]
  %v156 = vld [vmem:[%s1 + $0xe4] sm:$0xf]
  %v157 = vld [vmem:[%s1 + $0xe8] sm:$0xf]
  %v158 = vld [vmem:[%s1 + $0xec] sm:$0xf]
  %v159 = vld [vmem:[%s1 + $0xf0] sm:$0xf]
  %v160 = vld [vmem:[%s1 + $0xf4] sm:$0xf]
  %v161 = vld [vmem:[%s1 + $0xf8] sm:$0xf]
  %v162 = vld [vmem:[%s1 + $0xfc] sm:$0xf]
  %v163 = vld [vmem:[%s1 + $0x100] sm:$0xf]
  %v164 = vld [vmem:[%s1 + $0x104] sm:$0xf]
  %v165 = vld [vmem:[%s1 + $0x108] sm:$0xf]
  %v166 = vld [vmem:[%s1 + $0x10c] sm:$0xf]
  %v167 = vld [vmem:[%s1 + $0x110] sm:$0xf]
  %v168 = vld [vmem:[%s1 + $0x114] sm:$0xf]
  %v169 = vld [vmem:[%s1 + $0x118] sm:$0xf]
  %v170 = vld [vmem:[%s1 + $0x11c] sm:$0xf]
  %v219 = vunpack.c.l.b16 %v51
  %v220 = vunpack.c.h.b16 %v51
  %v221 = vunpack.c.l.b16 %v52
  %v222 = vunpack.c.h.b16 %v52
  %v223 = vunpack.c.l.b16 %v53
  %v224 = vunpack.c.l.b16 %v54
  %v225 = vunpack.c.h.b16 %v54
  %v226 = vunpack.c.l.b16 %v55
  %v227 = vunpack.c.h.b16 %v55
  %v228 = vunpack.c.l.b16 %v56
  %v229 = vunpack.c.l.b16 %v57
  %v230 = vunpack.c.h.b16 %v57
  %v231 = vunpack.c.l.b16 %v58
  %v232 = vunpack.c.h.b16 %v58
  %v233 = vunpack.c.l.b16 %v59
  %v234 = vunpack.c.l.b16 %v60
  %v235 = vunpack.c.h.b16 %v60
  %v236 = vunpack.c.l.b16 %v61
  %v237 = vunpack.c.h.b16 %v61
  %v238 = vunpack.c.l.b16 %v62
  %v239 = vunpack.c.l.b16 %v63
  %v240 = vunpack.c.h.b16 %v63
  %v241 = vunpack.c.l.b16 %v64
  %v242 = vunpack.c.h.b16 %v64
  %v243 = vunpack.c.l.b16 %v65
  %v244 = vunpack.c.l.b16 %v66
  %v245 = vunpack.c.h.b16 %v66
  %v246 = vunpack.c.l.b16 %v67
  %v247 = vunpack.c.h.b16 %v67
  %v248 = vunpack.c.l.b16 %v68
  %v249 = vunpack.c.l.b16 %v69
  %v250 = vunpack.c.h.b16 %v69
  %v251 = vunpack.c.l.b16 %v70
  %v252 = vunpack.c.h.b16 %v70
  %v253 = vunpack.c.l.b16 %v71
  %v254 = vunpack.c.l.b16 %v72
  %v255 = vunpack.c.h.b16 %v72
  %v256 = vunpack.c.l.b16 %v73
  %v257 = vunpack.c.h.b16 %v73
  %v258 = vunpack.c.l.b16 %v74
  %v259 = vunpack.c.l.b16 %v75
  %v260 = vunpack.c.h.b16 %v75
  %v261 = vunpack.c.l.b16 %v76
  %v262 = vunpack.c.h.b16 %v76
  %v263 = vunpack.c.l.b16 %v77
  %v264 = vunpack.c.l.b16 %v78
  %v265 = vunpack.c.h.b16 %v78
  %v266 = vunpack.c.l.b16 %v79
  %v267 = vunpack.c.h.b16 %v79
  %v268 = vunpack.c.l.b16 %v80
  %v269 = vunpack.c.l.b16 %v81
  %v270 = vunpack.c.h.b16 %v81
  %v271 = vunpack.c.l.b16 %v82
  %v272 = vunpack.c.h.b16 %v82
  %v273 = vunpack.c.l.b16 %v83
  %v274 = vunpack.c.l.b16 %v84
  %v275 = vunpack.c.h.b16 %v84
  %v276 = vunpack.c.l.b16 %v85
  %v277 = vunpack.c.h.b16 %v85
  %v278 = vunpack.c.l.b16 %v86
  %v279 = vunpack.c.l.b16 %v87
  %v280 = vunpack.c.h.b16 %v87
  %v281 = vunpack.c.l.b16 %v88
  %v282 = vunpack.c.h.b16 %v88
  %v283 = vunpack.c.l.b16 %v89
  %v284 = vunpack.c.l.b16 %v90
  %v285 = vunpack.c.h.b16 %v90
  %v286 = vunpack.c.l.b16 %v91
  %v287 = vunpack.c.h.b16 %v91
  %v288 = vunpack.c.l.b16 %v92
  %v289 = vunpack.c.l.b16 %v93
  %v290 = vunpack.c.h.b16 %v93
  %v291 = vunpack.c.l.b16 %v94
  %v292 = vunpack.c.h.b16 %v94
  %v293 = vunpack.c.l.b16 %v95
  %v294 = vunpack.c.l.b16 %v96
  %v295 = vunpack.c.h.b16 %v96
  %v296 = vunpack.c.l.b16 %v97
  %v297 = vunpack.c.h.b16 %v97
  %v298 = vunpack.c.l.b16 %v98
  %v299 = vpack.c.b16 %v224, %v219
  %v300 = vpack.c.b16 %v225, %v220
  %v301 = vpack.c.b16 %v226, %v221
  %v302 = vpack.c.b16 %v227, %v222
  %v303 = vpack.c.b16 %v228, %v223
  %v304 = vpack.c.b16 %v234, %v229
  %v305 = vpack.c.b16 %v235, %v230
  %v306 = vpack.c.b16 %v236, %v231
  %v307 = vpack.c.b16 %v237, %v232
  %v308 = vpack.c.b16 %v238, %v233
  %v309 = vpack.c.b16 %v244, %v239
  %v310 = vpack.c.b16 %v245, %v240
  %v311 = vpack.c.b16 %v246, %v241
  %v312 = vpack.c.b16 %v247, %v242
  %v313 = vpack.c.b16 %v248, %v243
  %v314 = vpack.c.b16 %v254, %v249
  %v315 = vpack.c.b16 %v255, %v250
  %v316 = vpack.c.b16 %v256, %v251
  %v317 = vpack.c.b16 %v257, %v252
  %v318 = vpack.c.b16 %v258, %v253
  %v319 = vpack.c.b16 %v264, %v259
  %v320 = vpack.c.b16 %v265, %v260
  %v321 = vpack.c.b16 %v266, %v261
  %v322 = vpack.c.b16 %v267, %v262
  %v323 = vpack.c.b16 %v268, %v263
  %v324 = vpack.c.b16 %v274, %v269
  %v325 = vpack.c.b16 %v275, %v270
  %v326 = vpack.c.b16 %v276, %v271
  %v327 = vpack.c.b16 %v277, %v272
  %v328 = vpack.c.b16 %v278, %v273
  %v329 = vpack.c.b16 %v284, %v279
  %v330 = vpack.c.b16 %v285, %v280
  %v331 = vpack.c.b16 %v286, %v281
  %v332 = vpack.c.b16 %v287, %v282
  %v333 = vpack.c.b16 %v288, %v283
  %v334 = vpack.c.b16 %v294, %v289
  %v335 = vpack.c.b16 %v295, %v290
  %v336 = vpack.c.b16 %v296, %v291
  %v337 = vpack.c.b16 %v297, %v292
  %v338 = vpack.c.b16 %v298, %v293
  %v443 = vunpack.c.l.b16 %v99
  %v444 = vunpack.c.l.b16 %v100
  %v445 = vunpack.c.l.b16 %v101
  %v446 = vunpack.c.l.b16 %v102
  %v447 = vunpack.c.l.b16 %v103
  %v448 = vunpack.c.l.b16 %v104
  %v449 = vunpack.c.l.b16 %v105
  %v450 = vunpack.c.l.b16 %v106
  %v451 = vunpack.c.l.b16 %v107
  %v452 = vunpack.c.l.b16 %v108
  %v453 = vunpack.c.l.b16 %v109
  %v454 = vunpack.c.l.b16 %v110
  %v455 = vunpack.c.l.b16 %v111
  %v456 = vunpack.c.l.b16 %v112
  %v457 = vunpack.c.l.b16 %v113
  %v458 = vunpack.c.l.b16 %v114
  %v459 = vunpack.c.l.b16 %v115
  %v460 = vunpack.c.l.b16 %v116
  %v461 = vunpack.c.l.b16 %v117
  %v462 = vunpack.c.l.b16 %v118
  %v463 = vunpack.c.l.b16 %v119
  %v464 = vunpack.c.l.b16 %v120
  %v465 = vunpack.c.l.b16 %v121
  %v466 = vunpack.c.l.b16 %v122
  %v467 = vunpack.c.l.b16 %v123
  %v468 = vunpack.c.l.b16 %v124
  %v469 = vunpack.c.l.b16 %v125
  %v470 = vunpack.c.l.b16 %v126
  %v471 = vunpack.c.l.b16 %v127
  %v472 = vunpack.c.l.b16 %v128
  %v473 = vunpack.c.l.b16 %v129
  %v474 = vunpack.c.l.b16 %v130
  %v475 = vunpack.c.l.b16 %v131
  %v476 = vunpack.c.l.b16 %v132
  %v477 = vunpack.c.l.b16 %v133
  %v478 = vunpack.c.l.b16 %v134
  %v479 = vunpack.c.l.b16 %v135
  %v480 = vunpack.c.l.b16 %v136
  %v481 = vunpack.c.l.b16 %v137
  %v482 = vunpack.c.l.b16 %v138
  %v483 = vunpack.c.l.b16 %v139
  %v484 = vunpack.c.l.b16 %v140
  %v485 = vunpack.c.l.b16 %v141
  %v486 = vunpack.c.l.b16 %v142
  %v487 = vunpack.c.l.b16 %v143
  %v488 = vunpack.c.l.b16 %v144
  %v489 = vunpack.c.l.b16 %v145
  %v490 = vunpack.c.l.b16 %v146
  %v491 = vunpack.c.l.b16 %v147
  %v492 = vunpack.c.l.b16 %v148
  %v493 = vunpack.c.l.b16 %v149
  %v494 = vunpack.c.l.b16 %v150
  %v495 = vunpack.c.l.b16 %v151
  %v496 = vunpack.c.l.b16 %v152
  %v497 = vunpack.c.l.b16 %v153
  %v498 = vunpack.c.l.b16 %v154
  %v499 = vunpack.c.l.b16 %v155
  %v500 = vunpack.c.l.b16 %v156
  %v501 = vunpack.c.l.b16 %v157
  %v502 = vunpack.c.l.b16 %v158
  %v503 = vunpack.c.l.b16 %v159
  %v504 = vunpack.c.l.b16 %v160
  %v505 = vunpack.c.l.b16 %v161
  %v506 = vunpack.c.l.b16 %v162
  %v507 = vunpack.c.l.b16 %v163
  %v508 = vunpack.c.l.b16 %v164
  %v509 = vunpack.c.l.b16 %v165
  %v510 = vunpack.c.l.b16 %v166
  %v511 = vunpack.c.l.b16 %v167
  %v512 = vunpack.c.l.b16 %v168
  %v513 = vunpack.c.l.b16 %v169
  %v514 = vunpack.c.l.b16 %v170
  %v515 = vpack.c.b16 %v444, %v443
  %v516 = vpack.c.b16 %v446, %v445
  %v517 = vpack.c.b16 %v448, %v447
  %v518 = vpack.c.b16 %v450, %v449
  %v519 = vpack.c.b16 %v452, %v451
  %v520 = vpack.c.b16 %v454, %v453
  %v521 = vpack.c.b16 %v456, %v455
  %v522 = vpack.c.b16 %v458, %v457
  %v523 = vpack.c.b16 %v460, %v459
  %v524 = vpack.c.b16 %v462, %v461
  %v525 = vpack.c.b16 %v464, %v463
  %v526 = vpack.c.b16 %v466, %v465
  %v527 = vpack.c.b16 %v468, %v467
  %v528 = vpack.c.b16 %v470, %v469
  %v529 = vpack.c.b16 %v472, %v471
  %v530 = vpack.c.b16 %v474, %v473
  %v531 = vpack.c.b16 %v476, %v475
  %v532 = vpack.c.b16 %v478, %v477
  %v533 = vpack.c.b16 %v480, %v479
  %v534 = vpack.c.b16 %v482, %v481
  %v535 = vpack.c.b16 %v484, %v483
  %v536 = vpack.c.b16 %v486, %v485
  %v537 = vpack.c.b16 %v488, %v487
  %v538 = vpack.c.b16 %v490, %v489
  %v539 = vpack.c.b16 %v492, %v491
  %v540 = vpack.c.b16 %v494, %v493
  %v541 = vpack.c.b16 %v496, %v495
  %v542 = vpack.c.b16 %v498, %v497
  %v543 = vpack.c.b16 %v500, %v499
  %v544 = vpack.c.b16 %v502, %v501
  %v545 = vpack.c.b16 %v504, %v503
  %v546 = vpack.c.b16 %v506, %v505
  %v547 = vpack.c.b16 %v508, %v507
  %v548 = vpack.c.b16 %v510, %v509
  %v549 = vpack.c.b16 %v512, %v511
  %v550 = vpack.c.b16 %v514, %v513
  %vm587 = vcmask 523264
  %v589 = vsel %vm587, %v303, 0
  %v592 = vsel %vm587, %v308, 0
  %v595 = vsel %vm587, %v313, 0
  %v598 = vsel %vm587, %v318, 0
  %v601 = vsel %vm587, %v323, 0
  %v604 = vsel %vm587, %v328, 0
  %v607 = vsel %vm587, %v333, 0
  %v610 = vsel %vm587, %v338, 0
  %612 = vmatprep.subr.bf16.mxu0 0
  %613 = vmatpush1.bf16.msra.mxu0 %v515
  %614 = vmatprep.subr.bf16.mxu0 0
  %615 = vmatpush1.bf16.msra.mxu0 %v516
  %616 = vmatprep.subr.bf16.mxu0 0
  %617 = vmatpush1.bf16.msra.mxu0 %v517
  %618 = vmatprep.subr.bf16.mxu0 0
  %619 = vmatpush1.bf16.msra.mxu0 %v518
  %620 = vmatprep.subr.bf16.mxu0 0
  %621 = vmatpush1.bf16.msra.mxu0 %v519
  %622 = vmatprep.subr.bf16.mxu0 0
  %623 = vmatpush1.bf16.msra.mxu0 %v520
  %624 = vmatprep.subr.bf16.mxu0 0
  %625 = vmatpush1.bf16.msra.mxu0 %v521
  %626 = vmatprep.subr.bf16.mxu0 0
  %627 = vmatpush1.bf16.msra.mxu0 %v522
  %628 = vmatprep.subr.bf16.mxu0 0
  %629 = vmatpush1.bf16.msra.mxu0 %v523
  %630 = vmatprep.subr.bf16.mxu0 0
  %631 = vmatpush1.bf16.msra.mxu0 %v524
  %632 = vmatprep.subr.bf16.mxu0 0
  %633 = vmatpush1.bf16.msra.mxu0 %v525
  %634 = vmatprep.subr.bf16.mxu0 0
  %635 = vmatpush1.bf16.msra.mxu0 %v526
  %636 = vmatprep.subr.bf16.mxu0 0
  %637 = vmatpush1.bf16.msra.mxu0 %v527
  %638 = vmatprep.subr.bf16.mxu0 0
  %639 = vmatpush1.bf16.msra.mxu0 %v528
  %640 = vmatprep.subr.bf16.mxu0 0
  %641 = vmatpush1.bf16.msra.mxu0 %v529
  %642 = vmatprep.subr.bf16.mxu0 0
  %643 = vmatpush1.bf16.msra.mxu0 %v530
  %644 = vmatprep.mubr.bf16.mxu0 %v300
  %645 = vmatmul.mubr.bf16.gmra.mrb[0].mxu0 %v299
  %v646 = vpop.f32.mrb[0].mxu0
  %v647 = vadd.f32 0.0, %v646
  %v648 = vpop.f32.mrb[0].mxu0
  %v649 = vpop.f32.mrb[0].mxu0
  %v650 = vadd.f32 0.0, %v649
  %v651 = vpop.f32.mrb[0].mxu0
  %652 = vmatprep.mubr.bf16.mxu0 %v305
  %653 = vmatmul.mubr.bf16.gmra.mrb[0].mxu0 %v304
  %v654 = vpop.f32.mrb[0].mxu0
  %v655 = vadd.f32 0.0, %v654
  %v656 = vpop.f32.mrb[0].mxu0
  %v657 = vpop.f32.mrb[0].mxu0
  %v658 = vadd.f32 0.0, %v657
  %v659 = vpop.f32.mrb[0].mxu0
  %660 = vmatprep.mubr.bf16.mxu0 %v310
  %661 = vmatmul.mubr.bf16.gmra.mrb[0].mxu0 %v309
  %v662 = vpop.f32.mrb[0].mxu0
  %v663 = vadd.f32 0.0, %v662
  %v664 = vpop.f32.mrb[0].mxu0
  %v665 = vpop.f32.mrb[0].mxu0
  %v666 = vadd.f32 0.0, %v665
  %v667 = vpop.f32.mrb[0].mxu0
  %668 = vmatprep.mubr.bf16.mxu0 %v315
  %669 = vmatmul.mubr.bf16.gmra.mrb[0].mxu0 %v314
  %v670 = vpop.f32.mrb[0].mxu0
  %v671 = vadd.f32 0.0, %v670
  %v672 = vpop.f32.mrb[0].mxu0
  %v673 = vpop.f32.mrb[0].mxu0
  %v674 = vadd.f32 0.0, %v673
  %v675 = vpop.f32.mrb[0].mxu0
  %676 = vmatprep.mubr.bf16.mxu0 %v320
  %677 = vmatmul.mubr.bf16.gmra.mrb[0].mxu0 %v319
  %v678 = vpop.f32.mrb[0].mxu0
  %v679 = vadd.f32 0.0, %v678
  %v680 = vpop.f32.mrb[0].mxu0
  %v681 = vpop.f32.mrb[0].mxu0
  %v682 = vadd.f32 0.0, %v681
  %v683 = vpop.f32.mrb[0].mxu0
  %684 = vmatprep.mubr.bf16.mxu0 %v325
  %685 = vmatmul.mubr.bf16.gmra.mrb[0].mxu0 %v324
  %v686 = vpop.f32.mrb[0].mxu0
  %v687 = vadd.f32 0.0, %v686
  %v688 = vpop.f32.mrb[0].mxu0
  %v689 = vpop.f32.mrb[0].mxu0
  %v690 = vadd.f32 0.0, %v689
  %v691 = vpop.f32.mrb[0].mxu0
  %692 = vmatprep.mubr.bf16.mxu0 %v330
  %693 = vmatmul.mubr.bf16.gmra.mrb[0].mxu0 %v329
  %v694 = vpop.f32.mrb[0].mxu0
  %v695 = vadd.f32 0.0, %v694
  %v696 = vpop.f32.mrb[0].mxu0
  %v697 = vpop.f32.mrb[0].mxu0
  %v698 = vadd.f32 0.0, %v697
  %v699 = vpop.f32.mrb[0].mxu0
  %700 = vmatprep.mubr.bf16.mxu0 %v335
  %701 = vmatmul.mubr.bf16.gmra.mrb[0].mxu0 %v334
  %v702 = vpop.f32.mrb[0].mxu0
  %v703 = vadd.f32 0.0, %v702
  %v704 = vpop.f32.mrb[0].mxu0
  %v705 = vpop.f32.mrb[0].mxu0
  %v706 = vadd.f32 0.0, %v705
  %v707 = vpop.f32.mrb[0].mxu0
  %708 = vdwg.mxu0
  %709 = vmatprep.subr.bf16.mxu0 0
  %710 = vmatpush1.bf16.msra.mxu0 %v531
  %711 = vmatprep.subr.bf16.mxu0 0
  %712 = vmatpush1.bf16.msra.mxu0 %v532
  %713 = vmatprep.subr.bf16.mxu0 0
  %714 = vmatpush1.bf16.msra.mxu0 %v533
  %715 = vmatprep.subr.bf16.mxu0 0
  %716 = vmatpush1.bf16.msra.mxu0 %v534
  %717 = vmatprep.subr.bf16.mxu0 0
  %718 = vmatpush1.bf16.msra.mxu0 %v535
  %719 = vmatprep.subr.bf16.mxu0 0
  %720 = vmatpush1.bf16.msra.mxu0 %v536
  %721 = vmatprep.subr.bf16.mxu0 0
  %722 = vmatpush1.bf16.msra.mxu0 %v537
  %723 = vmatprep.subr.bf16.mxu0 0
  %724 = vmatpush1.bf16.msra.mxu0 %v538
  %725 = vmatprep.subr.bf16.mxu0 0
  %726 = vmatpush1.bf16.msra.mxu0 %v539
  %727 = vmatprep.subr.bf16.mxu0 0
  %728 = vmatpush1.bf16.msra.mxu0 %v540
  %729 = vmatprep.subr.bf16.mxu0 0
  %730 = vmatpush1.bf16.msra.mxu0 %v541
  %731 = vmatprep.subr.bf16.mxu0 0
  %732 = vmatpush1.bf16.msra.mxu0 %v542
  %733 = vmatprep.subr.bf16.mxu0 0
  %734 = vmatpush1.bf16.msra.mxu0 %v543
  %735 = vmatprep.subr.bf16.mxu0 0
  %736 = vmatpush1.bf16.msra.mxu0 %v544
  %737 = vmatprep.subr.bf16.mxu0 0
  %738 = vmatpush1.bf16.msra.mxu0 %v545
  %739 = vmatprep.subr.bf16.mxu0 0
  %740 = vmatpush1.bf16.msra.mxu0 %v546
  %741 = vmatprep.mubr.bf16.mxu0 %v302
  %742 = vmatmul.mubr.bf16.gmra.mrb[0].mxu0 %v301
  %v743 = vpop.f32.mrb[0].mxu0
  %v744 = vadd.f32 %v647, %v743
  %v745 = vpop.f32.mrb[0].mxu0
  %v746 = vpop.f32.mrb[0].mxu0
  %v747 = vadd.f32 %v650, %v746
  %v748 = vpop.f32.mrb[0].mxu0
  %749 = vmatprep.mubr.bf16.mxu0 %v307
  %750 = vmatmul.mubr.bf16.gmra.mrb[0].mxu0 %v306
  %v751 = vpop.f32.mrb[0].mxu0
  %v752 = vadd.f32 %v655, %v751
  %v753 = vpop.f32.mrb[0].mxu0
  %v754 = vpop.f32.mrb[0].mxu0
  %v755 = vadd.f32 %v658, %v754
  %v756 = vpop.f32.mrb[0].mxu0
  %757 = vmatprep.mubr.bf16.mxu0 %v312
  %758 = vmatmul.mubr.bf16.gmra.mrb[0].mxu0 %v311
  %v759 = vpop.f32.mrb[0].mxu0
  %v760 = vadd.f32 %v663, %v759
  %v761 = vpop.f32.mrb[0].mxu0
  %v762 = vpop.f32.mrb[0].mxu0
  %v763 = vadd.f32 %v666, %v762
  %v764 = vpop.f32.mrb[0].mxu0
  %765 = vmatprep.mubr.bf16.mxu0 %v317
  %766 = vmatmul.mubr.bf16.gmra.mrb[0].mxu0 %v316
  %v767 = vpop.f32.mrb[0].mxu0
  %v768 = vadd.f32 %v671, %v767
  %v769 = vpop.f32.mrb[0].mxu0
  %v770 = vpop.f32.mrb[0].mxu0
  %v771 = vadd.f32 %v674, %v770
  %v772 = vpop.f32.mrb[0].mxu0
  %773 = vmatprep.mubr.bf16.mxu0 %v322
  %774 = vmatmul.mubr.bf16.gmra.mrb[0].mxu0 %v321
  %v775 = vpop.f32.mrb[0].mxu0
  %v776 = vadd.f32 %v679, %v775
  %v777 = vpop.f32.mrb[0].mxu0
  %v778 = vpop.f32.mrb[0].mxu0
  %v779 = vadd.f32 %v682, %v778
  %v780 = vpop.f32.mrb[0].mxu0
  %781 = vmatprep.mubr.bf16.mxu0 %v327
  %782 = vmatmul.mubr.bf16.gmra.mrb[0].mxu0 %v326
  %v783 = vpop.f32.mrb[0].mxu0
  %v784 = vadd.f32 %v687, %v783
  %v785 = vpop.f32.mrb[0].mxu0
  %v786 = vpop.f32.mrb[0].mxu0
  %v787 = vadd.f32 %v690, %v786
  %v788 = vpop.f32.mrb[0].mxu0
  %789 = vmatprep.mubr.bf16.mxu0 %v332
  %790 = vmatmul.mubr.bf16.gmra.mrb[0].mxu0 %v331
  %v791 = vpop.f32.mrb[0].mxu0
  %v792 = vadd.f32 %v695, %v791
  %v793 = vpop.f32.mrb[0].mxu0
  %v794 = vpop.f32.mrb[0].mxu0
  %v795 = vadd.f32 %v698, %v794
  %v796 = vpop.f32.mrb[0].mxu0
  %797 = vmatprep.mubr.bf16.mxu0 %v337
  %798 = vmatmul.mubr.bf16.gmra.mrb[0].mxu0 %v336
  %v799 = vpop.f32.mrb[0].mxu0
  %v800 = vadd.f32 %v703, %v799
  %v801 = vpop.f32.mrb[0].mxu0
  %v802 = vpop.f32.mrb[0].mxu0
  %v803 = vadd.f32 %v706, %v802
  %v804 = vpop.f32.mrb[0].mxu0
  %805 = vdwg.mxu0
  %806 = vmatprep.subr.bf16.mxu0 0
  %807 = vmatpush1.bf16.msra.mxu0 %v547
  %808 = vmatprep.subr.bf16.mxu0 0
  %809 = vmatpush1.bf16.msra.mxu0 %v548
  %810 = vmatprep.subr.bf16.mxu0 0
  %811 = vmatpush1.bf16.msra.mxu0 %v549
  %812 = vmatprep.subr.bf16.mxu0 0
  %813 = vmatpush1.bf16.msra.mxu0 %v550
  %814 = vmatprep.subr.bf16.mxu0 0
  %815 = vmatpush1.bf16.msra.mxu0 0
  %816 = vmatprep.subr.bf16.mxu0 0
  %817 = vmatpush1.bf16.msra.mxu0 0
  %818 = vmatprep.subr.bf16.mxu0 0
  %819 = vmatpush1.bf16.msra.mxu0 0
  %820 = vmatprep.subr.bf16.mxu0 0
  %821 = vmatpush1.bf16.msra.mxu0 0
  %822 = vmatprep.subr.bf16.mxu0 0
  %823 = vmatpush1.bf16.msra.mxu0 0
  %824 = vmatprep.subr.bf16.mxu0 0
  %825 = vmatpush1.bf16.msra.mxu0 0
  %826 = vmatprep.subr.bf16.mxu0 0
  %827 = vmatpush1.bf16.msra.mxu0 0
  %828 = vmatprep.subr.bf16.mxu0 0
  %829 = vmatpush1.bf16.msra.mxu0 0
  %830 = vmatprep.subr.bf16.mxu0 0
  %831 = vmatpush1.bf16.msra.mxu0 0
  %832 = vmatprep.subr.bf16.mxu0 0
  %833 = vmatpush1.bf16.msra.mxu0 0
  %834 = vmatprep.subr.bf16.mxu0 0
  %835 = vmatpush1.bf16.msra.mxu0 0
  %836 = vmatprep.subr.bf16.mxu0 0
  %837 = vmatpush1.bf16.msra.mxu0 0
  %838 = vmatprep.mubr.bf16.mxu0 0
  %839 = vmatmul.mubr.bf16.gmra.mrb[0].mxu0 %v589
  %v840 = vpop.f32.mrb[0].mxu0
  %v841 = vadd.f32 %v744, %v840
  %v842 = vpop.f32.mrb[0].mxu0
  %v843 = vpop.f32.mrb[0].mxu0
  %v844 = vadd.f32 %v747, %v843
  %v845 = vpop.f32.mrb[0].mxu0
  %846 = vmatprep.mubr.bf16.mxu0 0
  %847 = vmatmul.mubr.bf16.gmra.mrb[0].mxu0 %v592
  %v848 = vpop.f32.mrb[0].mxu0
  %v849 = vadd.f32 %v752, %v848
  %v850 = vpop.f32.mrb[0].mxu0
  %v851 = vpop.f32.mrb[0].mxu0
  %v852 = vadd.f32 %v755, %v851
  %v853 = vpop.f32.mrb[0].mxu0
  %854 = vmatprep.mubr.bf16.mxu0 0
  %855 = vmatmul.mubr.bf16.gmra.mrb[0].mxu0 %v595
  %v856 = vpop.f32.mrb[0].mxu0
  %v857 = vadd.f32 %v760, %v856
  %v858 = vpop.f32.mrb[0].mxu0
  %v859 = vpop.f32.mrb[0].mxu0
  %v860 = vadd.f32 %v763, %v859
  %v861 = vpop.f32.mrb[0].mxu0
  %862 = vmatprep.mubr.bf16.mxu0 0
  %863 = vmatmul.mubr.bf16.gmra.mrb[0].mxu0 %v598
  %v864 = vpop.f32.mrb[0].mxu0
  %v865 = vadd.f32 %v768, %v864
  %v866 = vpop.f32.mrb[0].mxu0
  %v867 = vpop.f32.mrb[0].mxu0
  %v868 = vadd.f32 %v771, %v867
  %v869 = vpop.f32.mrb[0].mxu0
  %870 = vmatprep.mubr.bf16.mxu0 0
  %871 = vmatmul.mubr.bf16.gmra.mrb[0].mxu0 %v601
  %v872 = vpop.f32.mrb[0].mxu0
  %v873 = vadd.f32 %v776, %v872
  %v874 = vpop.f32.mrb[0].mxu0
  %v875 = vpop.f32.mrb[0].mxu0
  %v876 = vadd.f32 %v779, %v875
  %v877 = vpop.f32.mrb[0].mxu0
  %878 = vmatprep.mubr.bf16.mxu0 0
  %879 = vmatmul.mubr.bf16.gmra.mrb[0].mxu0 %v604
  %v880 = vpop.f32.mrb[0].mxu0
  %v881 = vadd.f32 %v784, %v880
  %v882 = vpop.f32.mrb[0].mxu0
  %v883 = vpop.f32.mrb[0].mxu0
  %v884 = vadd.f32 %v787, %v883
  %v885 = vpop.f32.mrb[0].mxu0
  %886 = vmatprep.mubr.bf16.mxu0 0
  %887 = vmatmul.mubr.bf16.gmra.mrb[0].mxu0 %v607
  %v888 = vpop.f32.mrb[0].mxu0
  %v889 = vadd.f32 %v792, %v888
  %v890 = vpop.f32.mrb[0].mxu0
  %v891 = vpop.f32.mrb[0].mxu0
  %v892 = vadd.f32 %v795, %v891
  %v893 = vpop.f32.mrb[0].mxu0
  %894 = vmatprep.mubr.bf16.mxu0 0
  %895 = vmatmul.mubr.bf16.gmra.mrb[0].mxu0 %v610
  %v896 = vpop.f32.mrb[0].mxu0
  %v897 = vadd.f32 %v800, %v896
  %v898 = vpop.f32.mrb[0].mxu0
  %v899 = vpop.f32.mrb[0].mxu0
  %v900 = vadd.f32 %v803, %v899
  %v901 = vpop.f32.mrb[0].mxu0
  %902 = vdwg.mxu0
  %v903 = vadd.f32 %v35, %v841
  %v904 = vadd.f32 %v36, %v844
  %v905 = vadd.f32 %v37, %v849
  %v906 = vadd.f32 %v38, %v852
  %v907 = vadd.f32 %v39, %v857
  %v908 = vadd.f32 %v40, %v860
  %v909 = vadd.f32 %v41, %v865
  %v910 = vadd.f32 %v42, %v868
  %v911 = vadd.f32 %v43, %v873
  %v912 = vadd.f32 %v44, %v876
  %v913 = vadd.f32 %v45, %v881
  %v914 = vadd.f32 %v46, %v884
  %v915 = vadd.f32 %v47, %v889
  %v916 = vadd.f32 %v48, %v892
  %v917 = vadd.f32 %v49, %v897
  %v918 = vadd.f32 %v50, %v900
  %919 = vst [vmem:[#allocation2] sm:$0xff] %v903
  %920 = vst [vmem:[#allocation2 + $0x8] sm:$0xff] %v904
  %921 = vst [vmem:[#allocation2 + $0x10] sm:$0xff] %v905
  %922 = vst [vmem:[#allocation2 + $0x18] sm:$0xff] %v906
  %923 = vst [vmem:[#allocation2 + $0x20] sm:$0xff] %v907
  %924 = vst [vmem:[#allocation2 + $0x28] sm:$0xff] %v908
  %925 = vst [vmem:[#allocation2 + $0x30] sm:$0xff] %v909
  %926 = vst [vmem:[#allocation2 + $0x38] sm:$0xff] %v910
  %927 = vst [vmem:[#allocation2 + $0x40] sm:$0xff] %v911
  %928 = vst [vmem:[#allocation2 + $0x48] sm:$0xff] %v912
  %929 = vst [vmem:[#allocation2 + $0x50] sm:$0xff] %v913
  %930 = vst [vmem:[#allocation2 + $0x58] sm:$0xff] %v914
  %931 = vst [vmem:[#allocation2 + $0x60] sm:$0xff] %v915
  %932 = vst [vmem:[#allocation2 + $0x68] sm:$0xff] %v916
  %933 = vst [vmem:[#allocation2 + $0x70] sm:$0xff] %v917
  %934 = vst [vmem:[#allocation2 + $0x78] sm:$0xff] %v918
  // Predicated region
  $region18: #{basic_block_forward.3} parent=0 // pred_check
    %p935 = pneg %p15
  $region19: #{basic_block_forward.3} parent=0 // pred_check_branch
    %937 = sbr.rel (%p935) target = $region21
  $region20: #{basic_block_forward.3} parent=0 // pred_region
    %v938 = vld [vmem:[#allocation2] sm:$0xff]
    %v939 = vld [vmem:[#allocation2 + $0x8] sm:$0xff]
    %v940 = vld [vmem:[#allocation2 + $0x10] sm:$0xff]
    %v941 = vld [vmem:[#allocation2 + $0x18] sm:$0xff]
    %v942 = vld [vmem:[#allocation2 + $0x20] sm:$0xff]
    %v943 = vld [vmem:[#allocation2 + $0x28] sm:$0xff]
    %v944 = vld [vmem:[#allocation2 + $0x30] sm:$0xff]
    %v945 = vld [vmem:[#allocation2 + $0x38] sm:$0xff]
    %v946 = vld [vmem:[#allocation2 + $0x40] sm:$0xff]
    %v947 = vld [vmem:[#allocation2 + $0x48] sm:$0xff]
    %v948 = vld [vmem:[#allocation2 + $0x50] sm:$0xff]
    %v949 = vld [vmem:[#allocation2 + $0x58] sm:$0xff]
    %v950 = vld [vmem:[#allocation2 + $0x60] sm:$0xff]
    %v951 = vld [vmem:[#allocation2 + $0x68] sm:$0xff]
    %v952 = vld [vmem:[#allocation2 + $0x70] sm:$0xff]
    %v953 = vld [vmem:[#allocation2 + $0x78] sm:$0xff]
    %v954 = vld [vmem:[%s2] sm:$0x1]
    %v956 = vlaneseq
    %v957 = vshrl.u32 %v956, 7
    %v958 = vsub.s32 0, %v957
    %v959 = vrot.slane %v954, %v958
    %v961 = vadd.f32 %v938, %v959
    %v962 = vadd.f32 %v939, %v959
    %v963 = vadd.f32 %v940, %v959
    %v964 = vadd.f32 %v941, %v959
    %v965 = vadd.f32 %v942, %v959
    %v966 = vadd.f32 %v943, %v959
    %v967 = vadd.f32 %v944, %v959
    %v968 = vadd.f32 %v945, %v959
    %v969 = vadd.f32 %v946, %v959
    %v970 = vadd.f32 %v947, %v959
    %v971 = vadd.f32 %v948, %v959
    %v972 = vadd.f32 %v949, %v959
    %v973 = vadd.f32 %v950, %v959
    %v974 = vadd.f32 %v951, %v959
    %v975 = vadd.f32 %v952, %v959
    %v976 = vadd.f32 %v953, %v959
    %v977 = vmax.f32 %v961, 0.0
    %v978 = vmax.f32 %v962, 0.0
    %v979 = vmax.f32 %v963, 0.0
    %v980 = vmax.f32 %v964, 0.0
    %v981 = vmax.f32 %v965, 0.0
    %v982 = vmax.f32 %v966, 0.0
    %v983 = vmax.f32 %v967, 0.0
    %v984 = vmax.f32 %v968, 0.0
    %v985 = vmax.f32 %v969, 0.0
    %v986 = vmax.f32 %v970, 0.0
    %v987 = vmax.f32 %v971, 0.0
    %v988 = vmax.f32 %v972, 0.0
    %v989 = vmax.f32 %v973, 0.0
    %v990 = vmax.f32 %v974, 0.0
    %v991 = vmax.f32 %v975, 0.0
    %v992 = vmax.f32 %v976, 0.0
    %993 = vst [vmem:[%s3] sm:$0xff] %v977
    %994 = vst [vmem:[%s3 + $0x8] sm:$0xff] %v978
    %995 = vst [vmem:[%s3 + $0x10] sm:$0xff] %v979
    %996 = vst [vmem:[%s3 + $0x18] sm:$0xff] %v980
    %997 = vst [vmem:[%s3 + $0x20] sm:$0xff] %v981
    %998 = vst [vmem:[%s3 + $0x28] sm:$0xff] %v982
    %999 = vst [vmem:[%s3 + $0x30] sm:$0xff] %v983
    %1000 = vst [vmem:[%s3 + $0x38] sm:$0xff] %v984
    %1001 = vst [vmem:[%s3 + $0x40] sm:$0xff] %v985
    %1002 = vst [vmem:[%s3 + $0x48] sm:$0xff] %v986
    %1003 = vst [vmem:[%s3 + $0x50] sm:$0xff] %v987
    %1004 = vst [vmem:[%s3 + $0x58] sm:$0xff] %v988
    %1005 = vst [vmem:[%s3 + $0x60] sm:$0xff] %v989
    %1006 = vst [vmem:[%s3 + $0x68] sm:$0xff] %v990
    %1007 = vst [vmem:[%s3 + $0x70] sm:$0xff] %v991
    %1008 = vst [vmem:[%s3 + $0x78] sm:$0xff] %v992
  $region21: #{basic_block_forward.3} parent=0 // pred_fallthru
    _
  // Predicated region
  $region22: #{basic_block_forward.3} parent=0 // pred_check
    _
  $region23: #{basic_block_forward.3} parent=0 // pred_check_branch
    %1010 = sbr.rel (0) target = $region25
  $region24: #{basic_block_forward.3} parent=0 // pred_region
    _
  $region25: #{basic_block_forward.3} parent=0 // pred_fallthru
    _
  // Predicated region
  $region26: #{basic_block_forward.3} parent=0 // pred_check
    _
  $region27: #{basic_block_forward.3} parent=0 // pred_check_branch
    %1012 = sbr.rel (0) target = $region29
  $region28: #{basic_block_forward.3} parent=0 // pred_region
    _
  $region29: #{basic_block_forward.3} parent=0 // pred_fallthru
    _

// kernel: basic_block_forward.4
$region0: #{basic_block_forward.4}
  #allocation0 [shape = 'u32[]', space=smem, size = 0x4, offset = 0x4, fixed_abs, tag = 'smem constant byte address 0x4 - core index']
  #allocation1 [shape = 'u32[144,128]{1,0:T(1,128)}', space=vmem, size = 0x12000, scoped, tag = 'internal scratch']
  #allocation2 [shape = 'f32[128,128]{1,0:T(8,128)}', space=vmem, size = 0x10000, scoped, tag = 'scratch operand']
  %s0 = inlined_call_operand.vmem [shape: bf16[128,64], index: 0, kind: input, shape index: {}]
  %s1 = inlined_call_operand.vmem [shape: bf16[64,128], index: 1, kind: input, shape index: {}]
  %s2 = inlined_call_operand.vmem [shape: f32[1,128], index: 2, kind: input, shape index: {}]
  %s3 = inlined_call_operand.vmem [shape: f32[128,128], index: 3, kind: output, shape index: {}]
  %s4 = sld [smem:[#allocation0]]
  $region30: #{basic_block_forward.4} parent=0
    _
  %s6 = ssub.s32 1, %s4
  %s7 = scalar_select 0, %s6, %s4
  // Predicated region
  $region2: #{basic_block_forward.4} parent=0 // pred_check
    _
  $region3: #{basic_block_forward.4} parent=0 // pred_check_branch
    %9 = sbr.rel (0) target = $region5
  $region4: #{basic_block_forward.4} parent=0 // pred_region
    _
  $region5: #{basic_block_forward.4} parent=0 // pred_fallthru
    _
  // Predicated region
  $region6: #{basic_block_forward.4} parent=0 // pred_check
    _
  $region7: #{basic_block_forward.4} parent=0 // pred_check_branch
    %11 = sbr.rel (0) target = $region9
  $region8: #{basic_block_forward.4} parent=0 // pred_region
    _
  $region9: #{basic_block_forward.4} parent=0 // pred_fallthru
    _
  // Predicated region
  $region10: #{basic_block_forward.4} parent=0 // pred_check
    _
  $region11: #{basic_block_forward.4} parent=0 // pred_check_branch
    %13 = sbr.rel (0) target = $region13
  $region12: #{basic_block_forward.4} parent=0 // pred_region
    _
  $region13: #{basic_block_forward.4} parent=0 // pred_fallthru
    _
  %p15 = scmp.eq.s32.totalorder 0, 0
  // Predicated region
  $region14: #{basic_block_forward.4} parent=0 // pred_check
    %p16 = pneg %p15
  $region15: #{basic_block_forward.4} parent=0 // pred_check_branch
    %18 = sbr.rel (%p16) target = $region17
  $region16: #{basic_block_forward.4} parent=0 // pred_region
    %19 = vst [vmem:[#allocation2] sm:$0xff] 0.0
    %20 = vst [vmem:[#allocation2 + $0x8] sm:$0xff] 0.0
    %21 = vst [vmem:[#allocation2 + $0x10] sm:$0xff] 0.0
    %22 = vst [vmem:[#allocation2 + $0x18] sm:$0xff] 0.0
    %23 = vst [vmem:[#allocation2 + $0x20] sm:$0xff] 0.0
    %24 = vst [vmem:[#allocation2 + $0x28] sm:$0xff] 0.0
    %25 = vst [vmem:[#allocation2 + $0x30] sm:$0xff] 0.0
    %26 = vst [vmem:[#allocation2 + $0x38] sm:$0xff] 0.0
    %27 = vst [vmem:[#allocation2 + $0x40] sm:$0xff] 0.0
    %28 = vst [vmem:[#allocation2 + $0x48] sm:$0xff] 0.0
    %29 = vst [vmem:[#allocation2 + $0x50] sm:$0xff] 0.0
    %30 = vst [vmem:[#allocation2 + $0x58] sm:$0xff] 0.0
    %31 = vst [vmem:[#allocation2 + $0x60] sm:$0xff] 0.0
    %32 = vst [vmem:[#allocation2 + $0x68] sm:$0xff] 0.0
    %33 = vst [vmem:[#allocation2 + $0x70] sm:$0xff] 0.0
    %34 = vst [vmem:[#allocation2 + $0x78] sm:$0xff] 0.0
  $region17: #{basic_block_forward.4} parent=0 // pred_fallthru
    _
  %v35 = vld [vmem:[#allocation2] sm:$0xff]
  %v36 = vld [vmem:[#allocation2 + $0x8] sm:$0xff]
  %v37 = vld [vmem:[#allocation2 + $0x10] sm:$0xff]
  %v38 = vld [vmem:[#allocation2 + $0x18] sm:$0xff]
  %v39 = vld [vmem:[#allocation2 + $0x20] sm:$0xff]
  %v40 = vld [vmem:[#allocation2 + $0x28] sm:$0xff]
  %v41 = vld [vmem:[#allocation2 + $0x30] sm:$0xff]
  %v42 = vld [vmem:[#allocation2 + $0x38] sm:$0xff]
  %v43 = vld [vmem:[#allocation2 + $0x40] sm:$0xff]
  %v44 = vld [vmem:[#allocation2 + $0x48] sm:$0xff]
  %v45 = vld [vmem:[#allocation2 + $0x50] sm:$0xff]
  %v46 = vld [vmem:[#allocation2 + $0x58] sm:$0xff]
  %v47 = vld [vmem:[#allocation2 + $0x60] sm:$0xff]
  %v48 = vld [vmem:[#allocation2 + $0x68] sm:$0xff]
  %v49 = vld [vmem:[#allocation2 + $0x70] sm:$0xff]
  %v50 = vld [vmem:[#allocation2 + $0x78] sm:$0xff]
  %v51 = vld [vmem:[%s0] sm:$0xf]
  %v52 = vld [vmem:[%s0 + $0x4] sm:$0xf]
  %v53 = vld [vmem:[%s0 + $0x8] sm:$0xf]
  %v54 = vld [vmem:[%s0 + $0xc] sm:$0xf]
  %v55 = vld [vmem:[%s0 + $0x10] sm:$0xf]
  %v56 = vld [vmem:[%s0 + $0x14] sm:$0xf]
  %v57 = vld [vmem:[%s0 + $0x18] sm:$0xf]
  %v58 = vld [vmem:[%s0 + $0x1c] sm:$0xf]
  %v59 = vld [vmem:[%s0 + $0x20] sm:$0xf]
  %v60 = vld [vmem:[%s0 + $0x24] sm:$0xf]
  %v61 = vld [vmem:[%s0 + $0x28] sm:$0xf]
  %v62 = vld [vmem:[%s0 + $0x2c] sm:$0xf]
  %v63 = vld [vmem:[%s0 + $0x30] sm:$0xf]
  %v64 = vld [vmem:[%s0 + $0x34] sm:$0xf]
  %v65 = vld [vmem:[%s0 + $0x38] sm:$0xf]
  %v66 = vld [vmem:[%s0 + $0x3c] sm:$0xf]
  %v67 = vld [vmem:[%s1] sm:$0xf]
  %v68 = vld [vmem:[%s1 + $0x4] sm:$0xf]
  %v69 = vld [vmem:[%s1 + $0x8] sm:$0xf]
  %v70 = vld [vmem:[%s1 + $0xc] sm:$0xf]
  %v71 = vld [vmem:[%s1 + $0x10] sm:$0xf]
  %v72 = vld [vmem:[%s1 + $0x14] sm:$0xf]
  %v73 = vld [vmem:[%s1 + $0x18] sm:$0xf]
  %v74 = vld [vmem:[%s1 + $0x1c] sm:$0xf]
  %v91 = vunpack.c.l.b16 %v51
  %v92 = vunpack.c.l.b16 %v52
  %v93 = vunpack.c.l.b16 %v53
  %v94 = vunpack.c.l.b16 %v54
  %v95 = vunpack.c.l.b16 %v55
  %v96 = vunpack.c.l.b16 %v56
  %v97 = vunpack.c.l.b16 %v57
  %v98 = vunpack.c.l.b16 %v58
  %v99 = vunpack.c.l.b16 %v59
  %v100 = vunpack.c.l.b16 %v60
  %v101 = vunpack.c.l.b16 %v61
  %v102 = vunpack.c.l.b16 %v62
  %v103 = vunpack.c.l.b16 %v63
  %v104 = vunpack.c.l.b16 %v64
  %v105 = vunpack.c.l.b16 %v65
  %v106 = vunpack.c.l.b16 %v66
  %v107 = vpack.c.b16 %v92, %v91
  %v108 = vpack.c.b16 %v94, %v93
  %v109 = vpack.c.b16 %v96, %v95
  %v110 = vpack.c.b16 %v98, %v97
  %v111 = vpack.c.b16 %v100, %v99
  %v112 = vpack.c.b16 %v102, %v101
  %v113 = vpack.c.b16 %v104, %v103
  %v114 = vpack.c.b16 %v106, %v105
  %v123 = vunpack.c.l.b16 %v67
  %v124 = vunpack.c.l.b16 %v68
  %v125 = vunpack.c.l.b16 %v69
  %v126 = vunpack.c.l.b16 %v70
  %v127 = vunpack.c.l.b16 %v71
  %v128 = vunpack.c.l.b16 %v72
  %v129 = vunpack.c.l.b16 %v73
  %v130 = vunpack.c.l.b16 %v74
  %v131 = vpack.c.b16 %v124, %v123
  %v132 = vpack.c.b16 %v126, %v125
  %v133 = vpack.c.b16 %v128, %v127
  %v134 = vpack.c.b16 %v130, %v129
  %vm139 = vcmask 523264
  %v141 = vsel %vm139, %v107, 0
  %v144 = vsel %vm139, %v108, 0
  %v147 = vsel %vm139, %v109, 0
  %v150 = vsel %vm139, %v110, 0
  %v153 = vsel %vm139, %v111, 0
  %v156 = vsel %vm139, %v112, 0
  %v159 = vsel %vm139, %v113, 0
  %v162 = vsel %vm139, %v114, 0
  %164 = vmatprep.subr.bf16.mxu0 0
  %165 = vmatpush1.bf16.msra.mxu0 %v131
  %166 = vmatprep.subr.bf16.mxu0 0
  %167 = vmatpush1.bf16.msra.mxu0 %v132
  %168 = vmatprep.subr.bf16.mxu0 0
  %169 = vmatpush1.bf16.msra.mxu0 %v133
  %170 = vmatprep.subr.bf16.mxu0 0
  %171 = vmatpush1.bf16.msra.mxu0 %v134
  %172 = vmatprep.subr.bf16.mxu0 0
  %173 = vmatpush1.bf16.msra.mxu0 0
  %174 = vmatprep.subr.bf16.mxu0 0
  %175 = vmatpush1.bf16.msra.mxu0 0
  %176 = vmatprep.subr.bf16.mxu0 0
  %177 = vmatpush1.bf16.msra.mxu0 0
  %178 = vmatprep.subr.bf16.mxu0 0
  %179 = vmatpush1.bf16.msra.mxu0 0
  %180 = vmatprep.subr.bf16.mxu0 0
  %181 = vmatpush1.bf16.msra.mxu0 0
  %182 = vmatprep.subr.bf16.mxu0 0
  %183 = vmatpush1.bf16.msra.mxu0 0
  %184 = vmatprep.subr.bf16.mxu0 0
  %185 = vmatpush1.bf16.msra.mxu0 0
  %186 = vmatprep.subr.bf16.mxu0 0
  %187 = vmatpush1.bf16.msra.mxu0 0
  %188 = vmatprep.subr.bf16.mxu0 0
  %189 = vmatpush1.bf16.msra.mxu0 0
  %190 = vmatprep.subr.bf16.mxu0 0
  %191 = vmatpush1.bf16.msra.mxu0 0
  %192 = vmatprep.subr.bf16.mxu0 0
  %193 = vmatpush1.bf16.msra.mxu0 0
  %194 = vmatprep.subr.bf16.mxu0 0
  %195 = vmatpush1.bf16.msra.mxu0 0
  %196 = vmatprep.mubr.bf16.mxu0 0
  %197 = vmatmul.mubr.bf16.gmra.mrb[0].mxu0 %v141
  %v198 = vpop.f32.mrb[0].mxu0
  %v199 = vadd.f32 0.0, %v198
  %v200 = vpop.f32.mrb[0].mxu0
  %v201 = vpop.f32.mrb[0].mxu0
  %v202 = vadd.f32 0.0, %v201
  %v203 = vpop.f32.mrb[0].mxu0
  %204 = vmatprep.mubr.bf16.mxu0 0
  %205 = vmatmul.mubr.bf16.gmra.mrb[0].mxu0 %v144
  %v206 = vpop.f32.mrb[0].mxu0
  %v207 = vadd.f32 0.0, %v206
  %v208 = vpop.f32.mrb[0].mxu0
  %v209 = vpop.f32.mrb[0].mxu0
  %v210 = vadd.f32 0.0, %v209
  %v211 = vpop.f32.mrb[0].mxu0
  %212 = vmatprep.mubr.bf16.mxu0 0
  %213 = vmatmul.mubr.bf16.gmra.mrb[0].mxu0 %v147
  %v214 = vpop.f32.mrb[0].mxu0
  %v215 = vadd.f32 0.0, %v214
  %v216 = vpop.f32.mrb[0].mxu0
  %v217 = vpop.f32.mrb[0].mxu0
  %v218 = vadd.f32 0.0, %v217
  %v219 = vpop.f32.mrb[0].mxu0
  %220 = vmatprep.mubr.bf16.mxu0 0
  %221 = vmatmul.mubr.bf16.gmra.mrb[0].mxu0 %v150
  %v222 = vpop.f32.mrb[0].mxu0
  %v223 = vadd.f32 0.0, %v222
  %v224 = vpop.f32.mrb[0].mxu0
  %v225 = vpop.f32.mrb[0].mxu0
  %v226 = vadd.f32 0.0, %v225
  %v227 = vpop.f32.mrb[0].mxu0
  %228 = vmatprep.mubr.bf16.mxu0 0
  %229 = vmatmul.mubr.bf16.gmra.mrb[0].mxu0 %v153
  %v230 = vpop.f32.mrb[0].mxu0
  %v231 = vadd.f32 0.0, %v230
  %v232 = vpop.f32.mrb[0].mxu0
  %v233 = vpop.f32.mrb[0].mxu0
  %v234 = vadd.f32 0.0, %v233
  %v235 = vpop.f32.mrb[0].mxu0
  %236 = vmatprep.mubr.bf16.mxu0 0
  %237 = vmatmul.mubr.bf16.gmra.mrb[0].mxu0 %v156
  %v238 = vpop.f32.mrb[0].mxu0
  %v239 = vadd.f32 0.0, %v238
  %v240 = vpop.f32.mrb[0].mxu0
  %v241 = vpop.f32.mrb[0].mxu0
  %v242 = vadd.f32 0.0, %v241
  %v243 = vpop.f32.mrb[0].mxu0
  %244 = vmatprep.mubr.bf16.mxu0 0
  %245 = vmatmul.mubr.bf16.gmra.mrb[0].mxu0 %v159
  %v246 = vpop.f32.mrb[0].mxu0
  %v247 = vadd.f32 0.0, %v246
  %v248 = vpop.f32.mrb[0].mxu0
  %v249 = vpop.f32.mrb[0].mxu0
  %v250 = vadd.f32 0.0, %v249
  %v251 = vpop.f32.mrb[0].mxu0
  %252 = vmatprep.mubr.bf16.mxu0 0
  %253 = vmatmul.mubr.bf16.gmra.mrb[0].mxu0 %v162
  %v254 = vpop.f32.mrb[0].mxu0
  %v255 = vadd.f32 0.0, %v254
  %v256 = vpop.f32.mrb[0].mxu0
  %v257 = vpop.f32.mrb[0].mxu0
  %v258 = vadd.f32 0.0, %v257
  %v259 = vpop.f32.mrb[0].mxu0
  %260 = vdwg.mxu0
  %v261 = vadd.f32 %v35, %v199
  %v262 = vadd.f32 %v36, %v202
  %v263 = vadd.f32 %v37, %v207
  %v264 = vadd.f32 %v38, %v210
  %v265 = vadd.f32 %v39, %v215
  %v266 = vadd.f32 %v40, %v218
  %v267 = vadd.f32 %v41, %v223
  %v268 = vadd.f32 %v42, %v226
  %v269 = vadd.f32 %v43, %v231
  %v270 = vadd.f32 %v44, %v234
  %v271 = vadd.f32 %v45, %v239
  %v272 = vadd.f32 %v46, %v242
  %v273 = vadd.f32 %v47, %v247
  %v274 = vadd.f32 %v48, %v250
  %v275 = vadd.f32 %v49, %v255
  %v276 = vadd.f32 %v50, %v258
  %277 = vst [vmem:[#allocation2] sm:$0xff] %v261
  %278 = vst [vmem:[#allocation2 + $0x8] sm:$0xff] %v262
  %279 = vst [vmem:[#allocation2 + $0x10] sm:$0xff] %v263
  %280 = vst [vmem:[#allocation2 + $0x18] sm:$0xff] %v264
  %281 = vst [vmem:[#allocation2 + $0x20] sm:$0xff] %v265
  %282 = vst [vmem:[#allocation2 + $0x28] sm:$0xff] %v266
  %283 = vst [vmem:[#allocation2 + $0x30] sm:$0xff] %v267
  %284 = vst [vmem:[#allocation2 + $0x38] sm:$0xff] %v268
  %285 = vst [vmem:[#allocation2 + $0x40] sm:$0xff] %v269
  %286 = vst [vmem:[#allocation2 + $0x48] sm:$0xff] %v270
  %287 = vst [vmem:[#allocation2 + $0x50] sm:$0xff] %v271
  %288 = vst [vmem:[#allocation2 + $0x58] sm:$0xff] %v272
  %289 = vst [vmem:[#allocation2 + $0x60] sm:$0xff] %v273
  %290 = vst [vmem:[#allocation2 + $0x68] sm:$0xff] %v274
  %291 = vst [vmem:[#allocation2 + $0x70] sm:$0xff] %v275
  %292 = vst [vmem:[#allocation2 + $0x78] sm:$0xff] %v276
  // Predicated region
  $region18: #{basic_block_forward.4} parent=0 // pred_check
    %p293 = pneg %p15
  $region19: #{basic_block_forward.4} parent=0 // pred_check_branch
    %295 = sbr.rel (%p293) target = $region21
  $region20: #{basic_block_forward.4} parent=0 // pred_region
    %v296 = vld [vmem:[#allocation2] sm:$0xff]
    %v297 = vld [vmem:[#allocation2 + $0x8] sm:$0xff]
    %v298 = vld [vmem:[#allocation2 + $0x10] sm:$0xff]
    %v299 = vld [vmem:[#allocation2 + $0x18] sm:$0xff]
    %v300 = vld [vmem:[#allocation2 + $0x20] sm:$0xff]
    %v301 = vld [vmem:[#allocation2 + $0x28] sm:$0xff]
    %v302 = vld [vmem:[#allocation2 + $0x30] sm:$0xff]
    %v303 = vld [vmem:[#allocation2 + $0x38] sm:$0xff]
    %v304 = vld [vmem:[#allocation2 + $0x40] sm:$0xff]
    %v305 = vld [vmem:[#allocation2 + $0x48] sm:$0xff]
    %v306 = vld [vmem:[#allocation2 + $0x50] sm:$0xff]
    %v307 = vld [vmem:[#allocation2 + $0x58] sm:$0xff]
    %v308 = vld [vmem:[#allocation2 + $0x60] sm:$0xff]
    %v309 = vld [vmem:[#allocation2 + $0x68] sm:$0xff]
    %v310 = vld [vmem:[#allocation2 + $0x70] sm:$0xff]
    %v311 = vld [vmem:[#allocation2 + $0x78] sm:$0xff]
    %v312 = vld [vmem:[%s2] sm:$0x1]
    %v314 = vlaneseq
    %v315 = vshrl.u32 %v314, 7
    %v316 = vsub.s32 0, %v315
    %v317 = vrot.slane %v312, %v316
    %v319 = vadd.f32 %v296, %v317
    %v320 = vadd.f32 %v297, %v317
    %v321 = vadd.f32 %v298, %v317
    %v322 = vadd.f32 %v299, %v317
    %v323 = vadd.f32 %v300, %v317
    %v324 = vadd.f32 %v301, %v317
    %v325 = vadd.f32 %v302, %v317
    %v326 = vadd.f32 %v303, %v317
    %v327 = vadd.f32 %v304, %v317
    %v328 = vadd.f32 %v305, %v317
    %v329 = vadd.f32 %v306, %v317
    %v330 = vadd.f32 %v307, %v317
    %v331 = vadd.f32 %v308, %v317
    %v332 = vadd.f32 %v309, %v317
    %v333 = vadd.f32 %v310, %v317
    %v334 = vadd.f32 %v311, %v317
    %335 = vst [vmem:[%s3] sm:$0xff] %v319
    %336 = vst [vmem:[%s3 + $0x8] sm:$0xff] %v320
    %337 = vst [vmem:[%s3 + $0x10] sm:$0xff] %v321
    %338 = vst [vmem:[%s3 + $0x18] sm:$0xff] %v322
    %339 = vst [vmem:[%s3 + $0x20] sm:$0xff] %v323
    %340 = vst [vmem:[%s3 + $0x28] sm:$0xff] %v324
    %341 = vst [vmem:[%s3 + $0x30] sm:$0xff] %v325
    %342 = vst [vmem:[%s3 + $0x38] sm:$0xff] %v326
    %343 = vst [vmem:[%s3 + $0x40] sm:$0xff] %v327
    %344 = vst [vmem:[%s3 + $0x48] sm:$0xff] %v328
    %345 = vst [vmem:[%s3 + $0x50] sm:$0xff] %v329
    %346 = vst [vmem:[%s3 + $0x58] sm:$0xff] %v330
    %347 = vst [vmem:[%s3 + $0x60] sm:$0xff] %v331
    %348 = vst [vmem:[%s3 + $0x68] sm:$0xff] %v332
    %349 = vst [vmem:[%s3 + $0x70] sm:$0xff] %v333
    %350 = vst [vmem:[%s3 + $0x78] sm:$0xff] %v334
  $region21: #{basic_block_forward.4} parent=0 // pred_fallthru
    _
  // Predicated region
  $region22: #{basic_block_forward.4} parent=0 // pred_check
    _
  $region23: #{basic_block_forward.4} parent=0 // pred_check_branch
    %352 = sbr.rel (0) target = $region25
  $region24: #{basic_block_forward.4} parent=0 // pred_region
    _
  $region25: #{basic_block_forward.4} parent=0 // pred_fallthru
    _
  // Predicated region
  $region26: #{basic_block_forward.4} parent=0 // pred_check
    _
  $region27: #{basic_block_forward.4} parent=0 // pred_check_branch
    %354 = sbr.rel (0) target = $region29
  $region28: #{basic_block_forward.4} parent=0 // pred_region
    _
  $region29: #{basic_block_forward.4} parent=0 // pred_fallthru
    _

// kernel: basic_block_forward.5
$region0: #{basic_block_forward.5}
  #allocation0 [shape = 'u32[]', space=smem, size = 0x4, offset = 0x4, fixed_abs, tag = 'smem constant byte address 0x4 - core index']
  #allocation1 [shape = 'u32[144,128]{1,0:T(1,128)}', space=vmem, size = 0x12000, scoped, tag = 'internal scratch']
  #allocation2 [shape = 'f32[128,128]{1,0:T(8,128)}', space=vmem, size = 0x10000, scoped, tag = 'scratch operand']
  %s0 = inlined_call_operand.vmem [shape: bf16[128,1152], index: 0, kind: input, shape index: {}]
  %s1 = inlined_call_operand.vmem [shape: bf16[1152,128], index: 1, kind: input, shape index: {}]
  %s2 = inlined_call_operand.vmem [shape: f32[1,128], index: 2, kind: input, shape index: {}]
  %s3 = inlined_call_operand.vmem [shape: f32[128,128], index: 3, kind: input, shape index: {}]
  %s4 = inlined_call_operand.hbm [shape: f32[128,128], index: 4, kind: output, shape index: {}]
  %s5 = sld [smem:[#allocation0]]
  $region34: #{basic_block_forward.5} parent=0
    _
  %s7 = ssub.s32 1, %s5
  %s8 = scalar_select 0, %s7, %s5
  $region1: #{basic_block_forward.5} parent=0
    #allocation3 [shape = 'u8[65536]{0}', space=vmem, size = 0x10000, scoped, tag = 'output window, operand 0, single buffered']
    #allocation4 [shape = 's32[1]{0}', space=sflag, size = 0x4, scoped, tag = 'scoped memory for basic_block_forward.5']
    %9 = vsyncpa [#allocation4], 0
    // Predicated region
    $region2: #{basic_block_forward.5} parent=1 // pred_check
      _
    $region3: #{basic_block_forward.5} parent=1 // pred_check_branch
      %11 = sbr.rel (0) target = $region5
    $region4: #{basic_block_forward.5} parent=1 // pred_region
      _
    $region5: #{basic_block_forward.5} parent=1 // pred_fallthru
      _
    // Predicated region
    $region6: #{basic_block_forward.5} parent=1 // pred_check
      _
    $region7: #{basic_block_forward.5} parent=1 // pred_check_branch
      %13 = sbr.rel (0) target = $region9
    $region8: #{basic_block_forward.5} parent=1 // pred_region
      _
    $region9: #{basic_block_forward.5} parent=1 // pred_fallthru
      _
    // Predicated region
    $region10: #{basic_block_forward.5} parent=1 // pred_check
      _
    $region11: #{basic_block_forward.5} parent=1 // pred_check_branch
      %15 = sbr.rel (0) target = $region13
    $region12: #{basic_block_forward.5} parent=1 // pred_region
      _
    $region13: #{basic_block_forward.5} parent=1 // pred_fallthru
      _
    // Predicated region
    $region14: #{basic_block_forward.5} parent=1 // pred_check
      _
    $region15: #{basic_block_forward.5} parent=1 // pred_check_branch
      %17 = sbr.rel (0) target = $region17
    $region16: #{basic_block_forward.5} parent=1 // pred_region
      _
    $region17: #{basic_block_forward.5} parent=1 // pred_fallthru
      _
    %p19 = scmp.eq.s32.totalorder 0, 0
    // Predicated region
    $region18: #{basic_block_forward.5} parent=1 // pred_check
      %p20 = pneg %p19
    $region19: #{basic_block_forward.5} parent=1 // pred_check_branch
      %22 = sbr.rel (%p20) target = $region21
    $region20: #{basic_block_forward.5} parent=1 // pred_region
      %23 = vst [vmem:[#allocation2] sm:$0xff] 0.0
      %24 = vst [vmem:[#allocation2 + $0x8] sm:$0xff] 0.0
      %25 = vst [vmem:[#allocation2 + $0x10] sm:$0xff] 0.0
      %26 = vst [vmem:[#allocation2 + $0x18] sm:$0xff] 0.0
      %27 = vst [vmem:[#allocation2 + $0x20] sm:$0xff] 0.0
      %28 = vst [vmem:[#allocation2 + $0x28] sm:$0xff] 0.0
      %29 = vst [vmem:[#allocation2 + $0x30] sm:$0xff] 0.0
      %30 = vst [vmem:[#allocation2 + $0x38] sm:$0xff] 0.0
      %31 = vst [vmem:[#allocation2 + $0x40] sm:$0xff] 0.0
      %32 = vst [vmem:[#allocation2 + $0x48] sm:$0xff] 0.0
      %33 = vst [vmem:[#allocation2 + $0x50] sm:$0xff] 0.0
      %34 = vst [vmem:[#allocation2 + $0x58] sm:$0xff] 0.0
      %35 = vst [vmem:[#allocation2 + $0x60] sm:$0xff] 0.0
      %36 = vst [vmem:[#allocation2 + $0x68] sm:$0xff] 0.0
      %37 = vst [vmem:[#allocation2 + $0x70] sm:$0xff] 0.0
      %38 = vst [vmem:[#allocation2 + $0x78] sm:$0xff] 0.0
    $region21: #{basic_block_forward.5} parent=1 // pred_fallthru
      _
    %v39 = vld [vmem:[#allocation2] sm:$0xff]
    %v40 = vld [vmem:[#allocation2 + $0x8] sm:$0xff]
    %v41 = vld [vmem:[#allocation2 + $0x10] sm:$0xff]
    %v42 = vld [vmem:[#allocation2 + $0x18] sm:$0xff]
    %v43 = vld [vmem:[#allocation2 + $0x20] sm:$0xff]
    %v44 = vld [vmem:[#allocation2 + $0x28] sm:$0xff]
    %v45 = vld [vmem:[#allocation2 + $0x30] sm:$0xff]
    %v46 = vld [vmem:[#allocation2 + $0x38] sm:$0xff]
    %v47 = vld [vmem:[#allocation2 + $0x40] sm:$0xff]
    %v48 = vld [vmem:[#allocation2 + $0x48] sm:$0xff]
    %v49 = vld [vmem:[#allocation2 + $0x50] sm:$0xff]
    %v50 = vld [vmem:[#allocation2 + $0x58] sm:$0xff]
    %v51 = vld [vmem:[#allocation2 + $0x60] sm:$0xff]
    %v52 = vld [vmem:[#allocation2 + $0x68] sm:$0xff]
    %v53 = vld [vmem:[#allocation2 + $0x70] sm:$0xff]
    %v54 = vld [vmem:[#allocation2 + $0x78] sm:$0xff]
    %v55 = vld [vmem:[%s0] sm:$0xff]
    %v56 = vld [vmem:[%s0 + $0x8] sm:$0xff]
    %v57 = vld [vmem:[%s0 + $0x10] sm:$0xff]
    %v58 = vld [vmem:[%s0 + $0x18] sm:$0xff]
    %v59 = vld [vmem:[%s0 + $0x20] sm:$0xf]
    %v60 = vld [vmem:[%s0 + $0x24] sm:$0xff]
    %v61 = vld [vmem:[%s0 + $0x2c] sm:$0xff]
    %v62 = vld [vmem:[%s0 + $0x34] sm:$0xff]
    %v63 = vld [vmem:[%s0 + $0x3c] sm:$0xff]
    %v64 = vld [vmem:[%s0 + $0x44] sm:$0xf]
    %v65 = vld [vmem:[%s0 + $0x48] sm:$0xff]
    %v66 = vld [vmem:[%s0 + $0x50] sm:$0xff]
    %v67 = vld [vmem:[%s0 + $0x58] sm:$0xff]
    %v68 = vld [vmem:[%s0 + $0x60] sm:$0xff]
    %v69 = vld [vmem:[%s0 + $0x68] sm:$0xf]
    %v70 = vld [vmem:[%s0 + $0x6c] sm:$0xff]
    %v71 = vld [vmem:[%s0 + $0x74] sm:$0xff]
    %v72 = vld [vmem:[%s0 + $0x7c] sm:$0xff]
    %v73 = vld [vmem:[%s0 + $0x84] sm:$0xff]
    %v74 = vld [vmem:[%s0 + $0x8c] sm:$0xf]
    %v75 = vld [vmem:[%s0 + $0x90] sm:$0xff]
    %v76 = vld [vmem:[%s0 + $0x98] sm:$0xff]
    %v77 = vld [vmem:[%s0 + $0xa0] sm:$0xff]
    %v78 = vld [vmem:[%s0 + $0xa8] sm:$0xff]
    %v79 = vld [vmem:[%s0 + $0xb0] sm:$0xf]
    %v80 = vld [vmem:[%s0 + $0xb4] sm:$0xff]
    %v81 = vld [vmem:[%s0 + $0xbc] sm:$0xff]
    %v82 = vld [vmem:[%s0 + $0xc4] sm:$0xff]
    %v83 = vld [vmem:[%s0 + $0xcc] sm:$0xff]
    %v84 = vld [vmem:[%s0 + $0xd4] sm:$0xf]
    %v85 = vld [vmem:[%s0 + $0xd8] sm:$0xff]
    %v86 = vld [vmem:[%s0 + $0xe0] sm:$0xff]
    %v87 = vld [vmem:[%s0 + $0xe8] sm:$0xff]
    %v88 = vld [vmem:[%s0 + $0xf0] sm:$0xff]
    %v89 = vld [vmem:[%s0 + $0xf8] sm:$0xf]
    %v90 = vld [vmem:[%s0 + $0xfc] sm:$0xff]
    %v91 = vld [vmem:[%s0 + $0x104] sm:$0xff]
    %v92 = vld [vmem:[%s0 + $0x10c] sm:$0xff]
    %v93 = vld [vmem:[%s0 + $0x114] sm:$0xff]
    %v94 = vld [vmem:[%s0 + $0x11c] sm:$0xf]
    %v95 = vld [vmem:[%s0 + $0x120] sm:$0xff]
    %v96 = vld [vmem:[%s0 + $0x128] sm:$0xff]
    %v97 = vld [vmem:[%s0 + $0x130] sm:$0xff]
    %v98 = vld [vmem:[%s0 + $0x138] sm:$0xff]
    %v99 = vld [vmem:[%s0 + $0x140] sm:$0xf]
    %v100 = vld [vmem:[%s0 + $0x144] sm:$0xff]
    %v101 = vld [vmem:[%s0 + $0x14c] sm:$0xff]
    %v102 = vld [vmem:[%s0 + $0x154] sm:$0xff]
    %v103 = vld [vmem:[%s0 + $0x15c] sm:$0xff]
    %v104 = vld [vmem:[%s0 + $0x164] sm:$0xf]
    %v105 = vld [vmem:[%s0 + $0x168] sm:$0xff]
    %v106 = vld [vmem:[%s0 + $0x170] sm:$0xff]
    %v107 = vld [vmem:[%s0 + $0x178] sm:$0xff]
    %v108 = vld [vmem:[%s0 + $0x180] sm:$0xff]
    %v109 = vld [vmem:[%s0 + $0x188] sm:$0xf]
    %v110 = vld [vmem:[%s0 + $0x18c] sm:$0xff]
    %v111 = vld [vmem:[%s0 + $0x194] sm:$0xff]
    %v112 = vld [vmem:[%s0 + $0x19c] sm:$0xff]
    %v113 = vld [vmem:[%s0 + $0x1a4] sm:$0xff]
    %v114 = vld [vmem:[%s0 + $0x1ac] sm:$0xf]
    %v115 = vld [vmem:[%s0 + $0x1b0] sm:$0xff]
    %v116 = vld [vmem:[%s0 + $0x1b8] sm:$0xff]
    %v117 = vld [vmem:[%s0 + $0x1c0] sm:$0xff]
    %v118 = vld [vmem:[%s0 + $0x1c8] sm:$0xff]
    %v119 = vld [vmem:[%s0 + $0x1d0] sm:$0xf]
    %v120 = vld [vmem:[%s0 + $0x1d4] sm:$0xff]
    %v121 = vld [vmem:[%s0 + $0x1dc] sm:$0xff]
    %v122 = vld [vmem:[%s0 + $0x1e4] sm:$0xff]
    %v123 = vld [vmem:[%s0 + $0x1ec] sm:$0xff]
    %v124 = vld [vmem:[%s0 + $0x1f4] sm:$0xf]
    %v125 = vld [vmem:[%s0 + $0x1f8] sm:$0xff]
    %v126 = vld [vmem:[%s0 + $0x200] sm:$0xff]
    %v127 = vld [vmem:[%s0 + $0x208] sm:$0xff]
    %v128 = vld [vmem:[%s0 + $0x210] sm:$0xff]
    %v129 = vld [vmem:[%s0 + $0x218] sm:$0xf]
    %v130 = vld [vmem:[%s0 + $0x21c] sm:$0xff]
    %v131 = vld [vmem:[%s0 + $0x224] sm:$0xff]
    %v132 = vld [vmem:[%s0 + $0x22c] sm:$0xff]
    %v133 = vld [vmem:[%s0 + $0x234] sm:$0xff]
    %v134 = vld [vmem:[%s0 + $0x23c] sm:$0xf]
    %v135 = vld [vmem:[%s1] sm:$0xf]
    %v136 = vld [vmem:[%s1 + $0x4] sm:$0xf]
    %v137 = vld [vmem:[%s1 + $0x8] sm:$0xf]
    %v138 = vld [vmem:[%s1 + $0xc] sm:$0xf]
    %v139 = vld [vmem:[%s1 + $0x10] sm:$0xf]
    %v140 = vld [vmem:[%s1 + $0x14] sm:$0xf]
    %v141 = vld [vmem:[%s1 + $0x18] sm:$0xf]
    %v142 = vld [vmem:[%s1 + $0x1c] sm:$0xf]
    %v143 = vld [vmem:[%s1 + $0x20] sm:$0xf]
    %v144 = vld [vmem:[%s1 + $0x24] sm:$0xf]
    %v145 = vld [vmem:[%s1 + $0x28] sm:$0xf]
    %v146 = vld [vmem:[%s1 + $0x2c] sm:$0xf]
    %v147 = vld [vmem:[%s1 + $0x30] sm:$0xf]
    %v148 = vld [vmem:[%s1 + $0x34] sm:$0xf]
    %v149 = vld [vmem:[%s1 + $0x38] sm:$0xf]
    %v150 = vld [vmem:[%s1 + $0x3c] sm:$0xf]
    %v151 = vld [vmem:[%s1 + $0x40] sm:$0xf]
    %v152 = vld [vmem:[%s1 + $0x44] sm:$0xf]
    %v153 = vld [vmem:[%s1 + $0x48] sm:$0xf]
    %v154 = vld [vmem:[%s1 + $0x4c] sm:$0xf]
    %v155 = vld [vmem:[%s1 + $0x50] sm:$0xf]
    %v156 = vld [vmem:[%s1 + $0x54] sm:$0xf]
    %v157 = vld [vmem:[%s1 + $0x58] sm:$0xf]
    %v158 = vld [vmem:[%s1 + $0x5c] sm:$0xf]
    %v159 = vld [vmem:[%s1 + $0x60] sm:$0xf]
    %v160 = vld [vmem:[%s1 + $0x64] sm:$0xf]
    %v161 = vld [vmem:[%s1 + $0x68] sm:$0xf]
    %v162 = vld [vmem:[%s1 + $0x6c] sm:$0xf]
    %v163 = vld [vmem:[%s1 + $0x70] sm:$0xf]
    %v164 = vld [vmem:[%s1 + $0x74] sm:$0xf]
    %v165 = vld [vmem:[%s1 + $0x78] sm:$0xf]
    %v166 = vld [vmem:[%s1 + $0x7c] sm:$0xf]
    %v167 = vld [vmem:[%s1 + $0x80] sm:$0xf]
    %v168 = vld [vmem:[%s1 + $0x84] sm:$0xf]
    %v169 = vld [vmem:[%s1 + $0x88] sm:$0xf]
    %v170 = vld [vmem:[%s1 + $0x8c] sm:$0xf]
    %v171 = vld [vmem:[%s1 + $0x90] sm:$0xf]
    %v172 = vld [vmem:[%s1 + $0x94] sm:$0xf]
    %v173 = vld [vmem:[%s1 + $0x98] sm:$0xf]
    %v174 = vld [vmem:[%s1 + $0x9c] sm:$0xf]
    %v175 = vld [vmem:[%s1 + $0xa0] sm:$0xf]
    %v176 = vld [vmem:[%s1 + $0xa4] sm:$0xf]
    %v177 = vld [vmem:[%s1 + $0xa8] sm:$0xf]
    %v178 = vld [vmem:[%s1 + $0xac] sm:$0xf]
    %v179 = vld [vmem:[%s1 + $0xb0] sm:$0xf]
    %v180 = vld [vmem:[%s1 + $0xb4] sm:$0xf]
    %v181 = vld [vmem:[%s1 + $0xb8] sm:$0xf]
    %v182 = vld [vmem:[%s1 + $0xbc] sm:$0xf]
    %v183 = vld [vmem:[%s1 + $0xc0] sm:$0xf]
    %v184 = vld [vmem:[%s1 + $0xc4] sm:$0xf]
    %v185 = vld [vmem:[%s1 + $0xc8] sm:$0xf]
    %v186 = vld [vmem:[%s1 + $0xcc] sm:$0xf]
    %v187 = vld [vmem:[%s1 + $0xd0] sm:$0xf]
    %v188 = vld [vmem:[%s1 + $0xd4] sm:$0xf]
    %v189 = vld [vmem:[%s1 + $0xd8] sm:$0xf]
    %v190 = vld [vmem:[%s1 + $0xdc] sm:$0xf]
    %v191 = vld [vmem:[%s1 + $0xe0] sm:$0xf]
    %v192 = vld [vmem:[%s1 + $0xe4] sm:$0xf]
    %v193 = vld [vmem:[%s1 + $0xe8] sm:$0xf]
    %v194 = vld [vmem:[%s1 + $0xec] sm:$0xf]
    %v195 = vld [vmem:[%s1 + $0xf0] sm:$0xf]
    %v196 = vld [vmem:[%s1 + $0xf4] sm:$0xf]
    %v197 = vld [vmem:[%s1 + $0xf8] sm:$0xf]
    %v198 = vld [vmem:[%s1 + $0xfc] sm:$0xf]
    %v199 = vld [vmem:[%s1 + $0x100] sm:$0xf]
    %v200 = vld [vmem:[%s1 + $0x104] sm:$0xf]
    %v201 = vld [vmem:[%s1 + $0x108] sm:$0xf]
    %v202 = vld [vmem:[%s1 + $0x10c] sm:$0xf]
    %v203 = vld [vmem:[%s1 + $0x110] sm:$0xf]
    %v204 = vld [vmem:[%s1 + $0x114] sm:$0xf]
    %v205 = vld [vmem:[%s1 + $0x118] sm:$0xf]
    %v206 = vld [vmem:[%s1 + $0x11c] sm:$0xf]
    %v207 = vld [vmem:[%s1 + $0x120] sm:$0xf]
    %v208 = vld [vmem:[%s1 + $0x124] sm:$0xf]
    %v209 = vld [vmem:[%s1 + $0x128] sm:$0xf]
    %v210 = vld [vmem:[%s1 + $0x12c] sm:$0xf]
    %v211 = vld [vmem:[%s1 + $0x130] sm:$0xf]
    %v212 = vld [vmem:[%s1 + $0x134] sm:$0xf]
    %v213 = vld [vmem:[%s1 + $0x138] sm:$0xf]
    %v214 = vld [vmem:[%s1 + $0x13c] sm:$0xf]
    %v215 = vld [vmem:[%s1 + $0x140] sm:$0xf]
    %v216 = vld [vmem:[%s1 + $0x144] sm:$0xf]
    %v217 = vld [vmem:[%s1 + $0x148] sm:$0xf]
    %v218 = vld [vmem:[%s1 + $0x14c] sm:$0xf]
    %v219 = vld [vmem:[%s1 + $0x150] sm:$0xf]
    %v220 = vld [vmem:[%s1 + $0x154] sm:$0xf]
    %v221 = vld [vmem:[%s1 + $0x158] sm:$0xf]
    %v222 = vld [vmem:[%s1 + $0x15c] sm:$0xf]
    %v223 = vld [vmem:[%s1 + $0x160] sm:$0xf]
    %v224 = vld [vmem:[%s1 + $0x164] sm:$0xf]
    %v225 = vld [vmem:[%s1 + $0x168] sm:$0xf]
    %v226 = vld [vmem:[%s1 + $0x16c] sm:$0xf]
    %v227 = vld [vmem:[%s1 + $0x170] sm:$0xf]
    %v228 = vld [vmem:[%s1 + $0x174] sm:$0xf]
    %v229 = vld [vmem:[%s1 + $0x178] sm:$0xf]
    %v230 = vld [vmem:[%s1 + $0x17c] sm:$0xf]
    %v231 = vld [vmem:[%s1 + $0x180] sm:$0xf]
    %v232 = vld [vmem:[%s1 + $0x184] sm:$0xf]
    %v233 = vld [vmem:[%s1 + $0x188] sm:$0xf]
    %v234 = vld [vmem:[%s1 + $0x18c] sm:$0xf]
    %v235 = vld [vmem:[%s1 + $0x190] sm:$0xf]
    %v236 = vld [vmem:[%s1 + $0x194] sm:$0xf]
    %v237 = vld [vmem:[%s1 + $0x198] sm:$0xf]
    %v238 = vld [vmem:[%s1 + $0x19c] sm:$0xf]
    %v239 = vld [vmem:[%s1 + $0x1a0] sm:$0xf]
    %v240 = vld [vmem:[%s1 + $0x1a4] sm:$0xf]
    %v241 = vld [vmem:[%s1 + $0x1a8] sm:$0xf]
    %v242 = vld [vmem:[%s1 + $0x1ac] sm:$0xf]
    %v243 = vld [vmem:[%s1 + $0x1b0] sm:$0xf]
    %v244 = vld [vmem:[%s1 + $0x1b4] sm:$0xf]
    %v245 = vld [vmem:[%s1 + $0x1b8] sm:$0xf]
    %v246 = vld [vmem:[%s1 + $0x1bc] sm:$0xf]
    %v247 = vld [vmem:[%s1 + $0x1c0] sm:$0xf]
    %v248 = vld [vmem:[%s1 + $0x1c4] sm:$0xf]
    %v249 = vld [vmem:[%s1 + $0x1c8] sm:$0xf]
    %v250 = vld [vmem:[%s1 + $0x1cc] sm:$0xf]
    %v251 = vld [vmem:[%s1 + $0x1d0] sm:$0xf]
    %v252 = vld [vmem:[%s1 + $0x1d4] sm:$0xf]
    %v253 = vld [vmem:[%s1 + $0x1d8] sm:$0xf]
    %v254 = vld [vmem:[%s1 + $0x1dc] sm:$0xf]
    %v255 = vld [vmem:[%s1 + $0x1e0] sm:$0xf]
    %v256 = vld [vmem:[%s1 + $0x1e4] sm:$0xf]
    %v257 = vld [vmem:[%s1 + $0x1e8] sm:$0xf]
    %v258 = vld [vmem:[%s1 + $0x1ec] sm:$0xf]
    %v259 = vld [vmem:[%s1 + $0x1f0] sm:$0xf]
    %v260 = vld [vmem:[%s1 + $0x1f4] sm:$0xf]
    %v261 = vld [vmem:[%s1 + $0x1f8] sm:$0xf]
    %v262 = vld [vmem:[%s1 + $0x1fc] sm:$0xf]
    %v263 = vld [vmem:[%s1 + $0x200] sm:$0xf]
    %v264 = vld [vmem:[%s1 + $0x204] sm:$0xf]
    %v265 = vld [vmem:[%s1 + $0x208] sm:$0xf]
    %v266 = vld [vmem:[%s1 + $0x20c] sm:$0xf]
    %v267 = vld [vmem:[%s1 + $0x210] sm:$0xf]
    %v268 = vld [vmem:[%s1 + $0x214] sm:$0xf]
    %v269 = vld [vmem:[%s1 + $0x218] sm:$0xf]
    %v270 = vld [vmem:[%s1 + $0x21c] sm:$0xf]
    %v271 = vld [vmem:[%s1 + $0x220] sm:$0xf]
    %v272 = vld [vmem:[%s1 + $0x224] sm:$0xf]
    %v273 = vld [vmem:[%s1 + $0x228] sm:$0xf]
    %v274 = vld [vmem:[%s1 + $0x22c] sm:$0xf]
    %v275 = vld [vmem:[%s1 + $0x230] sm:$0xf]
    %v276 = vld [vmem:[%s1 + $0x234] sm:$0xf]
    %v277 = vld [vmem:[%s1 + $0x238] sm:$0xf]
    %v278 = vld [vmem:[%s1 + $0x23c] sm:$0xf]
    %v359 = vunpack.c.l.b16 %v55
    %v360 = vunpack.c.h.b16 %v55
    %v361 = vunpack.c.l.b16 %v56
    %v362 = vunpack.c.h.b16 %v56
    %v363 = vunpack.c.l.b16 %v57
    %v364 = vunpack.c.h.b16 %v57
    %v365 = vunpack.c.l.b16 %v58
    %v366 = vunpack.c.h.b16 %v58
    %v367 = vunpack.c.l.b16 %v59
    %v368 = vunpack.c.l.b16 %v60
    %v369 = vunpack.c.h.b16 %v60
    %v370 = vunpack.c.l.b16 %v61
    %v371 = vunpack.c.h.b16 %v61
    %v372 = vunpack.c.l.b16 %v62
    %v373 = vunpack.c.h.b16 %v62
    %v374 = vunpack.c.l.b16 %v63
    %v375 = vunpack.c.h.b16 %v63
    %v376 = vunpack.c.l.b16 %v64
    %v377 = vunpack.c.l.b16 %v65
    %v378 = vunpack.c.h.b16 %v65
    %v379 = vunpack.c.l.b16 %v66
    %v380 = vunpack.c.h.b16 %v66
    %v381 = vunpack.c.l.b16 %v67
    %v382 = vunpack.c.h.b16 %v67
    %v383 = vunpack.c.l.b16 %v68
    %v384 = vunpack.c.h.b16 %v68
    %v385 = vunpack.c.l.b16 %v69
    %v386 = vunpack.c.l.b16 %v70
    %v387 = vunpack.c.h.b16 %v70
    %v388 = vunpack.c.l.b16 %v71
    %v389 = vunpack.c.h.b16 %v71
    %v390 = vunpack.c.l.b16 %v72
    %v391 = vunpack.c.h.b16 %v72
    %v392 = vunpack.c.l.b16 %v73
    %v393 = vunpack.c.h.b16 %v73
    %v394 = vunpack.c.l.b16 %v74
    %v395 = vunpack.c.l.b16 %v75
    %v396 = vunpack.c.h.b16 %v75
    %v397 = vunpack.c.l.b16 %v76
    %v398 = vunpack.c.h.b16 %v76
    %v399 = vunpack.c.l.b16 %v77
    %v400 = vunpack.c.h.b16 %v77
    %v401 = vunpack.c.l.b16 %v78
    %v402 = vunpack.c.h.b16 %v78
    %v403 = vunpack.c.l.b16 %v79
    %v404 = vunpack.c.l.b16 %v80
    %v405 = vunpack.c.h.b16 %v80
    %v406 = vunpack.c.l.b16 %v81
    %v407 = vunpack.c.h.b16 %v81
    %v408 = vunpack.c.l.b16 %v82
    %v409 = vunpack.c.h.b16 %v82
    %v410 = vunpack.c.l.b16 %v83
    %v411 = vunpack.c.h.b16 %v83
    %v412 = vunpack.c.l.b16 %v84
    %v413 = vunpack.c.l.b16 %v85
    %v414 = vunpack.c.h.b16 %v85
    %v415 = vunpack.c.l.b16 %v86
    %v416 = vunpack.c.h.b16 %v86
    %v417 = vunpack.c.l.b16 %v87
    %v418 = vunpack.c.h.b16 %v87
    %v419 = vunpack.c.l.b16 %v88
    %v420 = vunpack.c.h.b16 %v88
    %v421 = vunpack.c.l.b16 %v89
    %v422 = vunpack.c.l.b16 %v90
    %v423 = vunpack.c.h.b16 %v90
    %v424 = vunpack.c.l.b16 %v91
    %v425 = vunpack.c.h.b16 %v91
    %v426 = vunpack.c.l.b16 %v92
    %v427 = vunpack.c.h.b16 %v92
    %v428 = vunpack.c.l.b16 %v93
    %v429 = vunpack.c.h.b16 %v93
    %v430 = vunpack.c.l.b16 %v94
    %v431 = vunpack.c.l.b16 %v95
    %v432 = vunpack.c.h.b16 %v95
    %v433 = vunpack.c.l.b16 %v96
    %v434 = vunpack.c.h.b16 %v96
    %v435 = vunpack.c.l.b16 %v97
    %v436 = vunpack.c.h.b16 %v97
    %v437 = vunpack.c.l.b16 %v98
    %v438 = vunpack.c.h.b16 %v98
    %v439 = vunpack.c.l.b16 %v99
    %v440 = vunpack.c.l.b16 %v100
    %v441 = vunpack.c.h.b16 %v100
    %v442 = vunpack.c.l.b16 %v101
    %v443 = vunpack.c.h.b16 %v101
    %v444 = vunpack.c.l.b16 %v102
    %v445 = vunpack.c.h.b16 %v102
    %v446 = vunpack.c.l.b16 %v103
    %v447 = vunpack.c.h.b16 %v103
    %v448 = vunpack.c.l.b16 %v104
    %v449 = vunpack.c.l.b16 %v105
    %v450 = vunpack.c.h.b16 %v105
    %v451 = vunpack.c.l.b16 %v106
    %v452 = vunpack.c.h.b16 %v106
    %v453 = vunpack.c.l.b16 %v107
    %v454 = vunpack.c.h.b16 %v107
    %v455 = vunpack.c.l.b16 %v108
    %v456 = vunpack.c.h.b16 %v108
    %v457 = vunpack.c.l.b16 %v109
    %v458 = vunpack.c.l.b16 %v110
    %v459 = vunpack.c.h.b16 %v110
    %v460 = vunpack.c.l.b16 %v111
    %v461 = vunpack.c.h.b16 %v111
    %v462 = vunpack.c.l.b16 %v112
    %v463 = vunpack.c.h.b16 %v112
    %v464 = vunpack.c.l.b16 %v113
    %v465 = vunpack.c.h.b16 %v113
    %v466 = vunpack.c.l.b16 %v114
    %v467 = vunpack.c.l.b16 %v115
    %v468 = vunpack.c.h.b16 %v115
    %v469 = vunpack.c.l.b16 %v116
    %v470 = vunpack.c.h.b16 %v116
    %v471 = vunpack.c.l.b16 %v117
    %v472 = vunpack.c.h.b16 %v117
    %v473 = vunpack.c.l.b16 %v118
    %v474 = vunpack.c.h.b16 %v118
    %v475 = vunpack.c.l.b16 %v119
    %v476 = vunpack.c.l.b16 %v120
    %v477 = vunpack.c.h.b16 %v120
    %v478 = vunpack.c.l.b16 %v121
    %v479 = vunpack.c.h.b16 %v121
    %v480 = vunpack.c.l.b16 %v122
    %v481 = vunpack.c.h.b16 %v122
    %v482 = vunpack.c.l.b16 %v123
    %v483 = vunpack.c.h.b16 %v123
    %v484 = vunpack.c.l.b16 %v124
    %v485 = vunpack.c.l.b16 %v125
    %v486 = vunpack.c.h.b16 %v125
    %v487 = vunpack.c.l.b16 %v126
    %v488 = vunpack.c.h.b16 %v126
    %v489 = vunpack.c.l.b16 %v127
    %v490 = vunpack.c.h.b16 %v127
    %v491 = vunpack.c.l.b16 %v128
    %v492 = vunpack.c.h.b16 %v128
    %v493 = vunpack.c.l.b16 %v129
    %v494 = vunpack.c.l.b16 %v130
    %v495 = vunpack.c.h.b16 %v130
    %v496 = vunpack.c.l.b16 %v131
    %v497 = vunpack.c.h.b16 %v131
    %v498 = vunpack.c.l.b16 %v132
    %v499 = vunpack.c.h.b16 %v132
    %v500 = vunpack.c.l.b16 %v133
    %v501 = vunpack.c.h.b16 %v133
    %v502 = vunpack.c.l.b16 %v134
    %v503 = vpack.c.b16 %v368, %v359
    %v504 = vpack.c.b16 %v369, %v360
    %v505 = vpack.c.b16 %v370, %v361
    %v506 = vpack.c.b16 %v371, %v362
    %v507 = vpack.c.b16 %v372, %v363
    %v508 = vpack.c.b16 %v373, %v364
    %v509 = vpack.c.b16 %v374, %v365
    %v510 = vpack.c.b16 %v375, %v366
    %v511 = vpack.c.b16 %v376, %v367
    %v512 = vpack.c.b16 %v386, %v377
    %v513 = vpack.c.b16 %v387, %v378
    %v514 = vpack.c.b16 %v388, %v379
    %v515 = vpack.c.b16 %v389, %v380
    %v516 = vpack.c.b16 %v390, %v381
    %v517 = vpack.c.b16 %v391, %v382
    %v518 = vpack.c.b16 %v392, %v383
    %v519 = vpack.c.b16 %v393, %v384
    %v520 = vpack.c.b16 %v394, %v385
    %v521 = vpack.c.b16 %v404, %v395
    %v522 = vpack.c.b16 %v405, %v396
    %v523 = vpack.c.b16 %v406, %v397
    %v524 = vpack.c.b16 %v407, %v398
    %v525 = vpack.c.b16 %v408, %v399
    %v526 = vpack.c.b16 %v409, %v400
    %v527 = vpack.c.b16 %v410, %v401
    %v528 = vpack.c.b16 %v411, %v402
    %v529 = vpack.c.b16 %v412, %v403
    %v530 = vpack.c.b16 %v422, %v413
    %v531 = vpack.c.b16 %v423, %v414
    %v532 = vpack.c.b16 %v424, %v415
    %v533 = vpack.c.b16 %v425, %v416
    %v534 = vpack.c.b16 %v426, %v417
    %v535 = vpack.c.b16 %v427, %v418
    %v536 = vpack.c.b16 %v428, %v419
    %v537 = vpack.c.b16 %v429, %v420
    %v538 = vpack.c.b16 %v430, %v421
    %v539 = vpack.c.b16 %v440, %v431
    %v540 = vpack.c.b16 %v441, %v432
    %v541 = vpack.c.b16 %v442, %v433
    %v542 = vpack.c.b16 %v443, %v434
    %v543 = vpack.c.b16 %v444, %v435
    %v544 = vpack.c.b16 %v445, %v436
    %v545 = vpack.c.b16 %v446, %v437
    %v546 = vpack.c.b16 %v447, %v438
    %v547 = vpack.c.b16 %v448, %v439
    %v548 = vpack.c.b16 %v458, %v449
    %v549 = vpack.c.b16 %v459, %v450
    %v550 = vpack.c.b16 %v460, %v451
    %v551 = vpack.c.b16 %v461, %v452
    %v552 = vpack.c.b16 %v462, %v453
    %v553 = vpack.c.b16 %v463, %v454
    %v554 = vpack.c.b16 %v464, %v455
    %v555 = vpack.c.b16 %v465, %v456
    %v556 = vpack.c.b16 %v466, %v457
    %v557 = vpack.c.b16 %v476, %v467
    %v558 = vpack.c.b16 %v477, %v468
    %v559 = vpack.c.b16 %v478, %v469
    %v560 = vpack.c.b16 %v479, %v470
    %v561 = vpack.c.b16 %v480, %v471
    %v562 = vpack.c.b16 %v481, %v472
    %v563 = vpack.c.b16 %v482, %v473
    %v564 = vpack.c.b16 %v483, %v474
    %v565 = vpack.c.b16 %v484, %v475
    %v566 = vpack.c.b16 %v494, %v485
    %v567 = vpack.c.b16 %v495, %v486
    %v568 = vpack.c.b16 %v496, %v487
    %v569 = vpack.c.b16 %v497, %v488
    %v570 = vpack.c.b16 %v498, %v489
    %v571 = vpack.c.b16 %v499, %v490
    %v572 = vpack.c.b16 %v500, %v491
    %v573 = vpack.c.b16 %v501, %v492
    %v574 = vpack.c.b16 %v502, %v493
    %v791 = vunpack.c.l.b16 %v135
    %v792 = vunpack.c.l.b16 %v136
    %v793 = vunpack.c.l.b16 %v137
    %v794 = vunpack.c.l.b16 %v138
    %v795 = vunpack.c.l.b16 %v139
    %v796 = vunpack.c.l.b16 %v140
    %v797 = vunpack.c.l.b16 %v141
    %v798 = vunpack.c.l.b16 %v142
    %v799 = vunpack.c.l.b16 %v143
    %v800 = vunpack.c.l.b16 %v144
    %v801 = vunpack.c.l.b16 %v145
    %v802 = vunpack.c.l.b16 %v146
    %v803 = vunpack.c.l.b16 %v147
    %v804 = vunpack.c.l.b16 %v148
    %v805 = vunpack.c.l.b16 %v149
    %v806 = vunpack.c.l.b16 %v150
    %v807 = vunpack.c.l.b16 %v151
    %v808 = vunpack.c.l.b16 %v152
    %v809 = vunpack.c.l.b16 %v153
    %v810 = vunpack.c.l.b16 %v154
    %v811 = vunpack.c.l.b16 %v155
    %v812 = vunpack.c.l.b16 %v156
    %v813 = vunpack.c.l.b16 %v157
    %v814 = vunpack.c.l.b16 %v158
    %v815 = vunpack.c.l.b16 %v159
    %v816 = vunpack.c.l.b16 %v160
    %v817 = vunpack.c.l.b16 %v161
    %v818 = vunpack.c.l.b16 %v162
    %v819 = vunpack.c.l.b16 %v163
    %v820 = vunpack.c.l.b16 %v164
    %v821 = vunpack.c.l.b16 %v165
    %v822 = vunpack.c.l.b16 %v166
    %v823 = vunpack.c.l.b16 %v167
    %v824 = vunpack.c.l.b16 %v168
    %v825 = vunpack.c.l.b16 %v169
    %v826 = vunpack.c.l.b16 %v170
    %v827 = vunpack.c.l.b16 %v171
    %v828 = vunpack.c.l.b16 %v172
    %v829 = vunpack.c.l.b16 %v173
    %v830 = vunpack.c.l.b16 %v174
    %v831 = vunpack.c.l.b16 %v175
    %v832 = vunpack.c.l.b16 %v176
    %v833 = vunpack.c.l.b16 %v177
    %v834 = vunpack.c.l.b16 %v178
    %v835 = vunpack.c.l.b16 %v179
    %v836 = vunpack.c.l.b16 %v180
    %v837 = vunpack.c.l.b16 %v181
    %v838 = vunpack.c.l.b16 %v182
    %v839 = vunpack.c.l.b16 %v183
    %v840 = vunpack.c.l.b16 %v184
    %v841 = vunpack.c.l.b16 %v185
    %v842 = vunpack.c.l.b16 %v186
    %v843 = vunpack.c.l.b16 %v187
    %v844 = vunpack.c.l.b16 %v188
    %v845 = vunpack.c.l.b16 %v189
    %v846 = vunpack.c.l.b16 %v190
    %v847 = vunpack.c.l.b16 %v191
    %v848 = vunpack.c.l.b16 %v192
    %v849 = vunpack.c.l.b16 %v193
    %v850 = vunpack.c.l.b16 %v194
    %v851 = vunpack.c.l.b16 %v195
    %v852 = vunpack.c.l.b16 %v196
    %v853 = vunpack.c.l.b16 %v197
    %v854 = vunpack.c.l.b16 %v198
    %v855 = vunpack.c.l.b16 %v199
    %v856 = vunpack.c.l.b16 %v200
    %v857 = vunpack.c.l.b16 %v201
    %v858 = vunpack.c.l.b16 %v202
    %v859 = vunpack.c.l.b16 %v203
    %v860 = vunpack.c.l.b16 %v204
    %v861 = vunpack.c.l.b16 %v205
    %v862 = vunpack.c.l.b16 %v206
    %v863 = vunpack.c.l.b16 %v207
    %v864 = vunpack.c.l.b16 %v208
    %v865 = vunpack.c.l.b16 %v209
    %v866 = vunpack.c.l.b16 %v210
    %v867 = vunpack.c.l.b16 %v211
    %v868 = vunpack.c.l.b16 %v212
    %v869 = vunpack.c.l.b16 %v213
    %v870 = vunpack.c.l.b16 %v214
    %v871 = vunpack.c.l.b16 %v215
    %v872 = vunpack.c.l.b16 %v216
    %v873 = vunpack.c.l.b16 %v217
    %v874 = vunpack.c.l.b16 %v218
    %v875 = vunpack.c.l.b16 %v219
    %v876 = vunpack.c.l.b16 %v220
    %v877 = vunpack.c.l.b16 %v221
    %v878 = vunpack.c.l.b16 %v222
    %v879 = vunpack.c.l.b16 %v223
    %v880 = vunpack.c.l.b16 %v224
    %v881 = vunpack.c.l.b16 %v225
    %v882 = vunpack.c.l.b16 %v226
    %v883 = vunpack.c.l.b16 %v227
    %v884 = vunpack.c.l.b16 %v228
    %v885 = vunpack.c.l.b16 %v229
    %v886 = vunpack.c.l.b16 %v230
    %v887 = vunpack.c.l.b16 %v231
    %v888 = vunpack.c.l.b16 %v232
    %v889 = vunpack.c.l.b16 %v233
    %v890 = vunpack.c.l.b16 %v234
    %v891 = vunpack.c.l.b16 %v235
    %v892 = vunpack.c.l.b16 %v236
    %v893 = vunpack.c.l.b16 %v237
    %v894 = vunpack.c.l.b16 %v238
    %v895 = vunpack.c.l.b16 %v239
    %v896 = vunpack.c.l.b16 %v240
    %v897 = vunpack.c.l.b16 %v241
    %v898 = vunpack.c.l.b16 %v242
    %v899 = vunpack.c.l.b16 %v243
    %v900 = vunpack.c.l.b16 %v244
    %v901 = vunpack.c.l.b16 %v245
    %v902 = vunpack.c.l.b16 %v246
    %v903 = vunpack.c.l.b16 %v247
    %v904 = vunpack.c.l.b16 %v248
    %v905 = vunpack.c.l.b16 %v249
    %v906 = vunpack.c.l.b16 %v250
    %v907 = vunpack.c.l.b16 %v251
    %v908 = vunpack.c.l.b16 %v252
    %v909 = vunpack.c.l.b16 %v253
    %v910 = vunpack.c.l.b16 %v254
    %v911 = vunpack.c.l.b16 %v255
    %v912 = vunpack.c.l.b16 %v256
    %v913 = vunpack.c.l.b16 %v257
    %v914 = vunpack.c.l.b16 %v258
    %v915 = vunpack.c.l.b16 %v259
    %v916 = vunpack.c.l.b16 %v260
    %v917 = vunpack.c.l.b16 %v261
    %v918 = vunpack.c.l.b16 %v262
    %v919 = vunpack.c.l.b16 %v263
    %v920 = vunpack.c.l.b16 %v264
    %v921 = vunpack.c.l.b16 %v265
    %v922 = vunpack.c.l.b16 %v266
    %v923 = vunpack.c.l.b16 %v267
    %v924 = vunpack.c.l.b16 %v268
    %v925 = vunpack.c.l.b16 %v269
    %v926 = vunpack.c.l.b16 %v270
    %v927 = vunpack.c.l.b16 %v271
    %v928 = vunpack.c.l.b16 %v272
    %v929 = vunpack.c.l.b16 %v273
    %v930 = vunpack.c.l.b16 %v274
    %v931 = vunpack.c.l.b16 %v275
    %v932 = vunpack.c.l.b16 %v276
    %v933 = vunpack.c.l.b16 %v277
    %v934 = vunpack.c.l.b16 %v278
    %v935 = vpack.c.b16 %v792, %v791
    %v936 = vpack.c.b16 %v794, %v793
    %v937 = vpack.c.b16 %v796, %v795
    %v938 = vpack.c.b16 %v798, %v797
    %v939 = vpack.c.b16 %v800, %v799
    %v940 = vpack.c.b16 %v802, %v801
    %v941 = vpack.c.b16 %v804, %v803
    %v942 = vpack.c.b16 %v806, %v805
    %v943 = vpack.c.b16 %v808, %v807
    %v944 = vpack.c.b16 %v810, %v809
    %v945 = vpack.c.b16 %v812, %v811
    %v946 = vpack.c.b16 %v814, %v813
    %v947 = vpack.c.b16 %v816, %v815
    %v948 = vpack.c.b16 %v818, %v817
    %v949 = vpack.c.b16 %v820, %v819
    %v950 = vpack.c.b16 %v822, %v821
    %v951 = vpack.c.b16 %v824, %v823
    %v952 = vpack.c.b16 %v826, %v825
    %v953 = vpack.c.b16 %v828, %v827
    %v954 = vpack.c.b16 %v830, %v829
    %v955 = vpack.c.b16 %v832, %v831
    %v956 = vpack.c.b16 %v834, %v833
    %v957 = vpack.c.b16 %v836, %v835
    %v958 = vpack.c.b16 %v838, %v837
    %v959 = vpack.c.b16 %v840, %v839
    %v960 = vpack.c.b16 %v842, %v841
    %v961 = vpack.c.b16 %v844, %v843
    %v962 = vpack.c.b16 %v846, %v845
    %v963 = vpack.c.b16 %v848, %v847
    %v964 = vpack.c.b16 %v850, %v849
    %v965 = vpack.c.b16 %v852, %v851
    %v966 = vpack.c.b16 %v854, %v853
    %v967 = vpack.c.b16 %v856, %v855
    %v968 = vpack.c.b16 %v858, %v857
    %v969 = vpack.c.b16 %v860, %v859
    %v970 = vpack.c.b16 %v862, %v861
    %v971 = vpack.c.b16 %v864, %v863
    %v972 = vpack.c.b16 %v866, %v865
    %v973 = vpack.c.b16 %v868, %v867
    %v974 = vpack.c.b16 %v870, %v869
    %v975 = vpack.c.b16 %v872, %v871
    %v976 = vpack.c.b16 %v874, %v873
    %v977 = vpack.c.b16 %v876, %v875
    %v978 = vpack.c.b16 %v878, %v877
    %v979 = vpack.c.b16 %v880, %v879
    %v980 = vpack.c.b16 %v882, %v881
    %v981 = vpack.c.b16 %v884, %v883
    %v982 = vpack.c.b16 %v886, %v885
    %v983 = vpack.c.b16 %v888, %v887
    %v984 = vpack.c.b16 %v890, %v889
    %v985 = vpack.c.b16 %v892, %v891
    %v986 = vpack.c.b16 %v894, %v893
    %v987 = vpack.c.b16 %v896, %v895
    %v988 = vpack.c.b16 %v898, %v897
    %v989 = vpack.c.b16 %v900, %v899
    %v990 = vpack.c.b16 %v902, %v901
    %v991 = vpack.c.b16 %v904, %v903
    %v992 = vpack.c.b16 %v906, %v905
    %v993 = vpack.c.b16 %v908, %v907
    %v994 = vpack.c.b16 %v910, %v909
    %v995 = vpack.c.b16 %v912, %v911
    %v996 = vpack.c.b16 %v914, %v913
    %v997 = vpack.c.b16 %v916, %v915
    %v998 = vpack.c.b16 %v918, %v917
    %v999 = vpack.c.b16 %v920, %v919
    %v1000 = vpack.c.b16 %v922, %v921
    %v1001 = vpack.c.b16 %v924, %v923
    %v1002 = vpack.c.b16 %v926, %v925
    %v1003 = vpack.c.b16 %v928, %v927
    %v1004 = vpack.c.b16 %v930, %v929
    %v1005 = vpack.c.b16 %v932, %v931
    %v1006 = vpack.c.b16 %v934, %v933
    %1079 = vmatprep.subr.bf16.mxu0 0
    %1080 = vmatpush1.bf16.msra.mxu0 %v935
    %1081 = vmatprep.subr.bf16.mxu0 0
    %1082 = vmatpush1.bf16.msra.mxu0 %v936
    %1083 = vmatprep.subr.bf16.mxu0 0
    %1084 = vmatpush1.bf16.msra.mxu0 %v937
    %1085 = vmatprep.subr.bf16.mxu0 0
    %1086 = vmatpush1.bf16.msra.mxu0 %v938
    %1087 = vmatprep.subr.bf16.mxu0 0
    %1088 = vmatpush1.bf16.msra.mxu0 %v939
    %1089 = vmatprep.subr.bf16.mxu0 0
    %1090 = vmatpush1.bf16.msra.mxu0 %v940
    %1091 = vmatprep.subr.bf16.mxu0 0
    %1092 = vmatpush1.bf16.msra.mxu0 %v941
    %1093 = vmatprep.subr.bf16.mxu0 0
    %1094 = vmatpush1.bf16.msra.mxu0 %v942
    %1095 = vmatprep.subr.bf16.mxu0 0
    %1096 = vmatpush1.bf16.msra.mxu0 %v943
    %1097 = vmatprep.subr.bf16.mxu0 0
    %1098 = vmatpush1.bf16.msra.mxu0 %v944
    %1099 = vmatprep.subr.bf16.mxu0 0
    %1100 = vmatpush1.bf16.msra.mxu0 %v945
    %1101 = vmatprep.subr.bf16.mxu0 0
    %1102 = vmatpush1.bf16.msra.mxu0 %v946
    %1103 = vmatprep.subr.bf16.mxu0 0
    %1104 = vmatpush1.bf16.msra.mxu0 %v947
    %1105 = vmatprep.subr.bf16.mxu0 0
    %1106 = vmatpush1.bf16.msra.mxu0 %v948
    %1107 = vmatprep.subr.bf16.mxu0 0
    %1108 = vmatpush1.bf16.msra.mxu0 %v949
    %1109 = vmatprep.subr.bf16.mxu0 0
    %1110 = vmatpush1.bf16.msra.mxu0 %v950
    %1111 = vmatprep.mubr.bf16.mxu0 %v504
    %1112 = vmatmul.mubr.bf16.gmra.mrb[0].mxu0 %v503
    %v1113 = vpop.f32.mrb[0].mxu0
    %v1114 = vadd.f32 0.0, %v1113
    %v1115 = vpop.f32.mrb[0].mxu0
    %v1116 = vpop.f32.mrb[0].mxu0
    %v1117 = vadd.f32 0.0, %v1116
    %v1118 = vpop.f32.mrb[0].mxu0
    %1119 = vmatprep.mubr.bf16.mxu0 %v513
    %1120 = vmatmul.mubr.bf16.gmra.mrb[0].mxu0 %v512
    %v1121 = vpop.f32.mrb[0].mxu0
    %v1122 = vadd.f32 0.0, %v1121
    %v1123 = vpop.f32.mrb[0].mxu0
    %v1124 = vpop.f32.mrb[0].mxu0
    %v1125 = vadd.f32 0.0, %v1124
    %v1126 = vpop.f32.mrb[0].mxu0
    %1127 = vmatprep.mubr.bf16.mxu0 %v522
    %1128 = vmatmul.mubr.bf16.gmra.mrb[0].mxu0 %v521
    %v1129 = vpop.f32.mrb[0].mxu0
    %v1130 = vadd.f32 0.0, %v1129
    %v1131 = vpop.f32.mrb[0].mxu0
    %v1132 = vpop.f32.mrb[0].mxu0
    %v1133 = vadd.f32 0.0, %v1132
    %v1134 = vpop.f32.mrb[0].mxu0
    %1135 = vmatprep.mubr.bf16.mxu0 %v531
    %1136 = vmatmul.mubr.bf16.gmra.mrb[0].mxu0 %v530
    %v1137 = vpop.f32.mrb[0].mxu0
    %v1138 = vadd.f32 0.0, %v1137
    %v1139 = vpop.f32.mrb[0].mxu0
    %v1140 = vpop.f32.mrb[0].mxu0
    %v1141 = vadd.f32 0.0, %v1140
    %v1142 = vpop.f32.mrb[0].mxu0
    %1143 = vmatprep.mubr.bf16.mxu0 %v540
    %1144 = vmatmul.mubr.bf16.gmra.mrb[0].mxu0 %v539
    %v1145 = vpop.f32.mrb[0].mxu0
    %v1146 = vadd.f32 0.0, %v1145
    %v1147 = vpop.f32.mrb[0].mxu0
    %v1148 = vpop.f32.mrb[0].mxu0
    %v1149 = vadd.f32 0.0, %v1148
    %v1150 = vpop.f32.mrb[0].mxu0
    %1151 = vmatprep.mubr.bf16.mxu0 %v549
    %1152 = vmatmul.mubr.bf16.gmra.mrb[0].mxu0 %v548
    %v1153 = vpop.f32.mrb[0].mxu0
    %v1154 = vadd.f32 0.0, %v1153
    %v1155 = vpop.f32.mrb[0].mxu0
    %v1156 = vpop.f32.mrb[0].mxu0
    %v1157 = vadd.f32 0.0, %v1156
    %v1158 = vpop.f32.mrb[0].mxu0
    %1159 = vmatprep.mubr.bf16.mxu0 %v558
    %1160 = vmatmul.mubr.bf16.gmra.mrb[0].mxu0 %v557
    %v1161 = vpop.f32.mrb[0].mxu0
    %v1162 = vadd.f32 0.0, %v1161
    %v1163 = vpop.f32.mrb[0].mxu0
    %v1164 = vpop.f32.mrb[0].mxu0
    %v1165 = vadd.f32 0.0, %v1164
    %v1166 = vpop.f32.mrb[0].mxu0
    %1167 = vmatprep.mubr.bf16.mxu0 %v567
    %1168 = vmatmul.mubr.bf16.gmra.mrb[0].mxu0 %v566
    %v1169 = vpop.f32.mrb[0].mxu0
    %v1170 = vadd.f32 0.0, %v1169
    %v1171 = vpop.f32.mrb[0].mxu0
    %v1172 = vpop.f32.mrb[0].mxu0
    %v1173 = vadd.f32 0.0, %v1172
    %v1174 = vpop.f32.mrb[0].mxu0
    %1175 = vdwg.mxu0
    %1176 = vmatprep.subr.bf16.mxu0 0
    %1177 = vmatpush1.bf16.msra.mxu0 %v951
    %1178 = vmatprep.subr.bf16.mxu0 0
    %1179 = vmatpush1.bf16.msra.mxu0 %v952
    %1180 = vmatprep.subr.bf16.mxu0 0
    %1181 = vmatpush1.bf16.msra.mxu0 %v953
    %1182 = vmatprep.subr.bf16.mxu0 0
    %1183 = vmatpush1.bf16.msra.mxu0 %v954
    %1184 = vmatprep.subr.bf16.mxu0 0
    %1185 = vmatpush1.bf16.msra.mxu0 %v955
    %1186 = vmatprep.subr.bf16.mxu0 0
    %1187 = vmatpush1.bf16.msra.mxu0 %v956
    %1188 = vmatprep.subr.bf16.mxu0 0
    %1189 = vmatpush1.bf16.msra.mxu0 %v957
    %1190 = vmatprep.subr.bf16.mxu0 0
    %1191 = vmatpush1.bf16.msra.mxu0 %v958
    %1192 = vmatprep.subr.bf16.mxu0 0
    %1193 = vmatpush1.bf16.msra.mxu0 %v959
    %1194 = vmatprep.subr.bf16.mxu0 0
    %1195 = vmatpush1.bf16.msra.mxu0 %v960
    %1196 = vmatprep.subr.bf16.mxu0 0
    %1197 = vmatpush1.bf16.msra.mxu0 %v961
    %1198 = vmatprep.subr.bf16.mxu0 0
    %1199 = vmatpush1.bf16.msra.mxu0 %v962
    %1200 = vmatprep.subr.bf16.mxu0 0
    %1201 = vmatpush1.bf16.msra.mxu0 %v963
    %1202 = vmatprep.subr.bf16.mxu0 0
    %1203 = vmatpush1.bf16.msra.mxu0 %v964
    %1204 = vmatprep.subr.bf16.mxu0 0
    %1205 = vmatpush1.bf16.msra.mxu0 %v965
    %1206 = vmatprep.subr.bf16.mxu0 0
    %1207 = vmatpush1.bf16.msra.mxu0 %v966
    %1208 = vmatprep.mubr.bf16.mxu0 %v506
    %1209 = vmatmul.mubr.bf16.gmra.mrb[0].mxu0 %v505
    %v1210 = vpop.f32.mrb[0].mxu0
    %v1211 = vadd.f32 %v1114, %v1210
    %v1212 = vpop.f32.mrb[0].mxu0
    %v1213 = vpop.f32.mrb[0].mxu0
    %v1214 = vadd.f32 %v1117, %v1213
    %v1215 = vpop.f32.mrb[0].mxu0
    %1216 = vmatprep.mubr.bf16.mxu0 %v515
    %1217 = vmatmul.mubr.bf16.gmra.mrb[0].mxu0 %v514
    %v1218 = vpop.f32.mrb[0].mxu0
    %v1219 = vadd.f32 %v1122, %v1218
    %v1220 = vpop.f32.mrb[0].mxu0
    %v1221 = vpop.f32.mrb[0].mxu0
    %v1222 = vadd.f32 %v1125, %v1221
    %v1223 = vpop.f32.mrb[0].mxu0
    %1224 = vmatprep.mubr.bf16.mxu0 %v524
    %1225 = vmatmul.mubr.bf16.gmra.mrb[0].mxu0 %v523
    %v1226 = vpop.f32.mrb[0].mxu0
    %v1227 = vadd.f32 %v1130, %v1226
    %v1228 = vpop.f32.mrb[0].mxu0
    %v1229 = vpop.f32.mrb[0].mxu0
    %v1230 = vadd.f32 %v1133, %v1229
    %v1231 = vpop.f32.mrb[0].mxu0
    %1232 = vmatprep.mubr.bf16.mxu0 %v533
    %1233 = vmatmul.mubr.bf16.gmra.mrb[0].mxu0 %v532
    %v1234 = vpop.f32.mrb[0].mxu0
    %v1235 = vadd.f32 %v1138, %v1234
    %v1236 = vpop.f32.mrb[0].mxu0
    %v1237 = vpop.f32.mrb[0].mxu0
    %v1238 = vadd.f32 %v1141, %v1237
    %v1239 = vpop.f32.mrb[0].mxu0
    %1240 = vmatprep.mubr.bf16.mxu0 %v542
    %1241 = vmatmul.mubr.bf16.gmra.mrb[0].mxu0 %v541
    %v1242 = vpop.f32.mrb[0].mxu0
    %v1243 = vadd.f32 %v1146, %v1242
    %v1244 = vpop.f32.mrb[0].mxu0
    %v1245 = vpop.f32.mrb[0].mxu0
    %v1246 = vadd.f32 %v1149, %v1245
    %v1247 = vpop.f32.mrb[0].mxu0
    %1248 = vmatprep.mubr.bf16.mxu0 %v551
    %1249 = vmatmul.mubr.bf16.gmra.mrb[0].mxu0 %v550
    %v1250 = vpop.f32.mrb[0].mxu0
    %v1251 = vadd.f32 %v1154, %v1250
    %v1252 = vpop.f32.mrb[0].mxu0
    %v1253 = vpop.f32.mrb[0].mxu0
    %v1254 = vadd.f32 %v1157, %v1253
    %v1255 = vpop.f32.mrb[0].mxu0
    %1256 = vmatprep.mubr.bf16.mxu0 %v560
    %1257 = vmatmul.mubr.bf16.gmra.mrb[0].mxu0 %v559
    %v1258 = vpop.f32.mrb[0].mxu0
    %v1259 = vadd.f32 %v1162, %v1258
    %v1260 = vpop.f32.mrb[0].mxu0
    %v1261 = vpop.f32.mrb[0].mxu0
    %v1262 = vadd.f32 %v1165, %v1261
    %v1263 = vpop.f32.mrb[0].mxu0
    %1264 = vmatprep.mubr.bf16.mxu0 %v569
    %1265 = vmatmul.mubr.bf16.gmra.mrb[0].mxu0 %v568
    %v1266 = vpop.f32.mrb[0].mxu0
    %v1267 = vadd.f32 %v1170, %v1266
    %v1268 = vpop.f32.mrb[0].mxu0
    %v1269 = vpop.f32.mrb[0].mxu0
    %v1270 = vadd.f32 %v1173, %v1269
    %v1271 = vpop.f32.mrb[0].mxu0
    %1272 = vdwg.mxu0
    %1273 = vmatprep.subr.bf16.mxu0 0
    %1274 = vmatpush1.bf16.msra.mxu0 %v967
    %1275 = vmatprep.subr.bf16.mxu0 0
    %1276 = vmatpush1.bf16.msra.mxu0 %v968
    %1277 = vmatprep.subr.bf16.mxu0 0
    %1278 = vmatpush1.bf16.msra.mxu0 %v969
    %1279 = vmatprep.subr.bf16.mxu0 0
    %1280 = vmatpush1.bf16.msra.mxu0 %v970
    %1281 = vmatprep.subr.bf16.mxu0 0
    %1282 = vmatpush1.bf16.msra.mxu0 %v971
    %1283 = vmatprep.subr.bf16.mxu0 0
    %1284 = vmatpush1.bf16.msra.mxu0 %v972
    %1285 = vmatprep.subr.bf16.mxu0 0
    %1286 = vmatpush1.bf16.msra.mxu0 %v973
    %1287 = vmatprep.subr.bf16.mxu0 0
    %1288 = vmatpush1.bf16.msra.mxu0 %v974
    %1289 = vmatprep.subr.bf16.mxu0 0
    %1290 = vmatpush1.bf16.msra.mxu0 %v975
    %1291 = vmatprep.subr.bf16.mxu0 0
    %1292 = vmatpush1.bf16.msra.mxu0 %v976
    %1293 = vmatprep.subr.bf16.mxu0 0
    %1294 = vmatpush1.bf16.msra.mxu0 %v977
    %1295 = vmatprep.subr.bf16.mxu0 0
    %1296 = vmatpush1.bf16.msra.mxu0 %v978
    %1297 = vmatprep.subr.bf16.mxu0 0
    %1298 = vmatpush1.bf16.msra.mxu0 %v979
    %1299 = vmatprep.subr.bf16.mxu0 0
    %1300 = vmatpush1.bf16.msra.mxu0 %v980
    %1301 = vmatprep.subr.bf16.mxu0 0
    %1302 = vmatpush1.bf16.msra.mxu0 %v981
    %1303 = vmatprep.subr.bf16.mxu0 0
    %1304 = vmatpush1.bf16.msra.mxu0 %v982
    %1305 = vmatprep.mubr.bf16.mxu0 %v508
    %1306 = vmatmul.mubr.bf16.gmra.mrb[0].mxu0 %v507
    %v1307 = vpop.f32.mrb[0].mxu0
    %v1308 = vadd.f32 %v1211, %v1307
    %v1309 = vpop.f32.mrb[0].mxu0
    %v1310 = vpop.f32.mrb[0].mxu0
    %v1311 = vadd.f32 %v1214, %v1310
    %v1312 = vpop.f32.mrb[0].mxu0
    %1313 = vmatprep.mubr.bf16.mxu0 %v517
    %1314 = vmatmul.mubr.bf16.gmra.mrb[0].mxu0 %v516
    %v1315 = vpop.f32.mrb[0].mxu0
    %v1316 = vadd.f32 %v1219, %v1315
    %v1317 = vpop.f32.mrb[0].mxu0
    %v1318 = vpop.f32.mrb[0].mxu0
    %v1319 = vadd.f32 %v1222, %v1318
    %v1320 = vpop.f32.mrb[0].mxu0
    %1321 = vmatprep.mubr.bf16.mxu0 %v526
    %1322 = vmatmul.mubr.bf16.gmra.mrb[0].mxu0 %v525
    %v1323 = vpop.f32.mrb[0].mxu0
    %v1324 = vadd.f32 %v1227, %v1323
    %v1325 = vpop.f32.mrb[0].mxu0
    %v1326 = vpop.f32.mrb[0].mxu0
    %v1327 = vadd.f32 %v1230, %v1326
    %v1328 = vpop.f32.mrb[0].mxu0
    %1329 = vmatprep.mubr.bf16.mxu0 %v535
    %1330 = vmatmul.mubr.bf16.gmra.mrb[0].mxu0 %v534
    %v1331 = vpop.f32.mrb[0].mxu0
    %v1332 = vadd.f32 %v1235, %v1331
    %v1333 = vpop.f32.mrb[0].mxu0
    %v1334 = vpop.f32.mrb[0].mxu0
    %v1335 = vadd.f32 %v1238, %v1334
    %v1336 = vpop.f32.mrb[0].mxu0
    %1337 = vmatprep.mubr.bf16.mxu0 %v544
    %1338 = vmatmul.mubr.bf16.gmra.mrb[0].mxu0 %v543
    %v1339 = vpop.f32.mrb[0].mxu0
    %v1340 = vadd.f32 %v1243, %v1339
    %v1341 = vpop.f32.mrb[0].mxu0
    %v1342 = vpop.f32.mrb[0].mxu0
    %v1343 = vadd.f32 %v1246, %v1342
    %v1344 = vpop.f32.mrb[0].mxu0
    %1345 = vmatprep.mubr.bf16.mxu0 %v553
    %1346 = vmatmul.mubr.bf16.gmra.mrb[0].mxu0 %v552
    %v1347 = vpop.f32.mrb[0].mxu0
    %v1348 = vadd.f32 %v1251, %v1347
    %v1349 = vpop.f32.mrb[0].mxu0
    %v1350 = vpop.f32.mrb[0].mxu0
    %v1351 = vadd.f32 %v1254, %v1350
    %v1352 = vpop.f32.mrb[0].mxu0
    %1353 = vmatprep.mubr.bf16.mxu0 %v562
    %1354 = vmatmul.mubr.bf16.gmra.mrb[0].mxu0 %v561
    %v1355 = vpop.f32.mrb[0].mxu0
    %v1356 = vadd.f32 %v1259, %v1355
    %v1357 = vpop.f32.mrb[0].mxu0
    %v1358 = vpop.f32.mrb[0].mxu0
    %v1359 = vadd.f32 %v1262, %v1358
    %v1360 = vpop.f32.mrb[0].mxu0
    %1361 = vmatprep.mubr.bf16.mxu0 %v571
    %1362 = vmatmul.mubr.bf16.gmra.mrb[0].mxu0 %v570
    %v1363 = vpop.f32.mrb[0].mxu0
    %v1364 = vadd.f32 %v1267, %v1363
    %v1365 = vpop.f32.mrb[0].mxu0
    %v1366 = vpop.f32.mrb[0].mxu0
    %v1367 = vadd.f32 %v1270, %v1366
    %v1368 = vpop.f32.mrb[0].mxu0
    %1369 = vdwg.mxu0
    %1370 = vmatprep.subr.bf16.mxu0 0
    %1371 = vmatpush1.bf16.msra.mxu0 %v983
    %1372 = vmatprep.subr.bf16.mxu0 0
    %1373 = vmatpush1.bf16.msra.mxu0 %v984
    %1374 = vmatprep.subr.bf16.mxu0 0
    %1375 = vmatpush1.bf16.msra.mxu0 %v985
    %1376 = vmatprep.subr.bf16.mxu0 0
    %1377 = vmatpush1.bf16.msra.mxu0 %v986
    %1378 = vmatprep.subr.bf16.mxu0 0
    %1379 = vmatpush1.bf16.msra.mxu0 %v987
    %1380 = vmatprep.subr.bf16.mxu0 0
    %1381 = vmatpush1.bf16.msra.mxu0 %v988
    %1382 = vmatprep.subr.bf16.mxu0 0
    %1383 = vmatpush1.bf16.msra.mxu0 %v989
    %1384 = vmatprep.subr.bf16.mxu0 0
    %1385 = vmatpush1.bf16.msra.mxu0 %v990
    %1386 = vmatprep.subr.bf16.mxu0 0
    %1387 = vmatpush1.bf16.msra.mxu0 %v991
    %1388 = vmatprep.subr.bf16.mxu0 0
    %1389 = vmatpush1.bf16.msra.mxu0 %v992
    %1390 = vmatprep.subr.bf16.mxu0 0
    %1391 = vmatpush1.bf16.msra.mxu0 %v993
    %1392 = vmatprep.subr.bf16.mxu0 0
    %1393 = vmatpush1.bf16.msra.mxu0 %v994
    %1394 = vmatprep.subr.bf16.mxu0 0
    %1395 = vmatpush1.bf16.msra.mxu0 %v995
    %1396 = vmatprep.subr.bf16.mxu0 0
    %1397 = vmatpush1.bf16.msra.mxu0 %v996
    %1398 = vmatprep.subr.bf16.mxu0 0
    %1399 = vmatpush1.bf16.msra.mxu0 %v997
    %1400 = vmatprep.subr.bf16.mxu0 0
    %1401 = vmatpush1.bf16.msra.mxu0 %v998
    %1402 = vmatprep.mubr.bf16.mxu0 %v510
    %1403 = vmatmul.mubr.bf16.gmra.mrb[0].mxu0 %v509
    %v1404 = vpop.f32.mrb[0].mxu0
    %v1405 = vadd.f32 %v1308, %v1404
    %v1406 = vpop.f32.mrb[0].mxu0
    %v1407 = vpop.f32.mrb[0].mxu0
    %v1408 = vadd.f32 %v1311, %v1407
    %v1409 = vpop.f32.mrb[0].mxu0
    %1410 = vmatprep.mubr.bf16.mxu0 %v519
    %1411 = vmatmul.mubr.bf16.gmra.mrb[0].mxu0 %v518
    %v1412 = vpop.f32.mrb[0].mxu0
    %v1413 = vadd.f32 %v1316, %v1412
    %v1414 = vpop.f32.mrb[0].mxu0
    %v1415 = vpop.f32.mrb[0].mxu0
    %v1416 = vadd.f32 %v1319, %v1415
    %v1417 = vpop.f32.mrb[0].mxu0
    %1418 = vmatprep.mubr.bf16.mxu0 %v528
    %1419 = vmatmul.mubr.bf16.gmra.mrb[0].mxu0 %v527
    %v1420 = vpop.f32.mrb[0].mxu0
    %v1421 = vadd.f32 %v1324, %v1420
    %v1422 = vpop.f32.mrb[0].mxu0
    %v1423 = vpop.f32.mrb[0].mxu0
    %v1424 = vadd.f32 %v1327, %v1423
    %v1425 = vpop.f32.mrb[0].mxu0
    %1426 = vmatprep.mubr.bf16.mxu0 %v537
    %1427 = vmatmul.mubr.bf16.gmra.mrb[0].mxu0 %v536
    %v1428 = vpop.f32.mrb[0].mxu0
    %v1429 = vadd.f32 %v1332, %v1428
    %v1430 = vpop.f32.mrb[0].mxu0
    %v1431 = vpop.f32.mrb[0].mxu0
    %v1432 = vadd.f32 %v1335, %v1431
    %v1433 = vpop.f32.mrb[0].mxu0
    %1434 = vmatprep.mubr.bf16.mxu0 %v546
    %1435 = vmatmul.mubr.bf16.gmra.mrb[0].mxu0 %v545
    %v1436 = vpop.f32.mrb[0].mxu0
    %v1437 = vadd.f32 %v1340, %v1436
    %v1438 = vpop.f32.mrb[0].mxu0
    %v1439 = vpop.f32.mrb[0].mxu0
    %v1440 = vadd.f32 %v1343, %v1439
    %v1441 = vpop.f32.mrb[0].mxu0
    %1442 = vmatprep.mubr.bf16.mxu0 %v555
    %1443 = vmatmul.mubr.bf16.gmra.mrb[0].mxu0 %v554
    %v1444 = vpop.f32.mrb[0].mxu0
    %v1445 = vadd.f32 %v1348, %v1444
    %v1446 = vpop.f32.mrb[0].mxu0
    %v1447 = vpop.f32.mrb[0].mxu0
    %v1448 = vadd.f32 %v1351, %v1447
    %v1449 = vpop.f32.mrb[0].mxu0
    %1450 = vmatprep.mubr.bf16.mxu0 %v564
    %1451 = vmatmul.mubr.bf16.gmra.mrb[0].mxu0 %v563
    %v1452 = vpop.f32.mrb[0].mxu0
    %v1453 = vadd.f32 %v1356, %v1452
    %v1454 = vpop.f32.mrb[0].mxu0
    %v1455 = vpop.f32.mrb[0].mxu0
    %v1456 = vadd.f32 %v1359, %v1455
    %v1457 = vpop.f32.mrb[0].mxu0
    %1458 = vmatprep.mubr.bf16.mxu0 %v573
    %1459 = vmatmul.mubr.bf16.gmra.mrb[0].mxu0 %v572
    %v1460 = vpop.f32.mrb[0].mxu0
    %v1461 = vadd.f32 %v1364, %v1460
    %v1462 = vpop.f32.mrb[0].mxu0
    %v1463 = vpop.f32.mrb[0].mxu0
    %v1464 = vadd.f32 %v1367, %v1463
    %v1465 = vpop.f32.mrb[0].mxu0
    %1466 = vdwg.mxu0
    %1467 = vmatprep.subr.bf16.mxu0 0
    %1468 = vmatpush1.bf16.msra.mxu0 %v999
    %1469 = vmatprep.subr.bf16.mxu0 0
    %1470 = vmatpush1.bf16.msra.mxu0 %v1000
    %1471 = vmatprep.subr.bf16.mxu0 0
    %1472 = vmatpush1.bf16.msra.mxu0 %v1001
    %1473 = vmatprep.subr.bf16.mxu0 0
    %1474 = vmatpush1.bf16.msra.mxu0 %v1002
    %1475 = vmatprep.subr.bf16.mxu0 0
    %1476 = vmatpush1.bf16.msra.mxu0 %v1003
    %1477 = vmatprep.subr.bf16.mxu0 0
    %1478 = vmatpush1.bf16.msra.mxu0 %v1004
    %1479 = vmatprep.subr.bf16.mxu0 0
    %1480 = vmatpush1.bf16.msra.mxu0 %v1005
    %1481 = vmatprep.subr.bf16.mxu0 0
    %1482 = vmatpush1.bf16.msra.mxu0 %v1006
    %1483 = vmatprep.subr.bf16.mxu0 0
    %1484 = vmatpush1.bf16.msra.mxu0 0
    %1485 = vmatprep.subr.bf16.mxu0 0
    %1486 = vmatpush1.bf16.msra.mxu0 0
    %1487 = vmatprep.subr.bf16.mxu0 0
    %1488 = vmatpush1.bf16.msra.mxu0 0
    %1489 = vmatprep.subr.bf16.mxu0 0
    %1490 = vmatpush1.bf16.msra.mxu0 0
    %1491 = vmatprep.subr.bf16.mxu0 0
    %1492 = vmatpush1.bf16.msra.mxu0 0
    %1493 = vmatprep.subr.bf16.mxu0 0
    %1494 = vmatpush1.bf16.msra.mxu0 0
    %1495 = vmatprep.subr.bf16.mxu0 0
    %1496 = vmatpush1.bf16.msra.mxu0 0
    %1497 = vmatprep.subr.bf16.mxu0 0
    %1498 = vmatpush1.bf16.msra.mxu0 0
    %1499 = vmatprep.mubr.bf16.mxu0 0
    %1500 = vmatmul.mubr.bf16.gmra.mrb[0].mxu0 %v511
    %v1501 = vpop.f32.mrb[0].mxu0
    %v1502 = vadd.f32 %v1405, %v1501
    %v1503 = vpop.f32.mrb[0].mxu0
    %v1504 = vpop.f32.mrb[0].mxu0
    %v1505 = vadd.f32 %v1408, %v1504
    %v1506 = vpop.f32.mrb[0].mxu0
    %1507 = vmatprep.mubr.bf16.mxu0 0
    %1508 = vmatmul.mubr.bf16.gmra.mrb[0].mxu0 %v520
    %v1509 = vpop.f32.mrb[0].mxu0
    %v1510 = vadd.f32 %v1413, %v1509
    %v1511 = vpop.f32.mrb[0].mxu0
    %v1512 = vpop.f32.mrb[0].mxu0
    %v1513 = vadd.f32 %v1416, %v1512
    %v1514 = vpop.f32.mrb[0].mxu0
    %1515 = vmatprep.mubr.bf16.mxu0 0
    %1516 = vmatmul.mubr.bf16.gmra.mrb[0].mxu0 %v529
    %v1517 = vpop.f32.mrb[0].mxu0
    %v1518 = vadd.f32 %v1421, %v1517
    %v1519 = vpop.f32.mrb[0].mxu0
    %v1520 = vpop.f32.mrb[0].mxu0
    %v1521 = vadd.f32 %v1424, %v1520
    %v1522 = vpop.f32.mrb[0].mxu0
    %1523 = vmatprep.mubr.bf16.mxu0 0
    %1524 = vmatmul.mubr.bf16.gmra.mrb[0].mxu0 %v538
    %v1525 = vpop.f32.mrb[0].mxu0
    %v1526 = vadd.f32 %v1429, %v1525
    %v1527 = vpop.f32.mrb[0].mxu0
    %v1528 = vpop.f32.mrb[0].mxu0
    %v1529 = vadd.f32 %v1432, %v1528
    %v1530 = vpop.f32.mrb[0].mxu0
    %1531 = vmatprep.mubr.bf16.mxu0 0
    %1532 = vmatmul.mubr.bf16.gmra.mrb[0].mxu0 %v547
    %v1533 = vpop.f32.mrb[0].mxu0
    %v1534 = vadd.f32 %v1437, %v1533
    %v1535 = vpop.f32.mrb[0].mxu0
    %v1536 = vpop.f32.mrb[0].mxu0
    %v1537 = vadd.f32 %v1440, %v1536
    %v1538 = vpop.f32.mrb[0].mxu0
    %1539 = vmatprep.mubr.bf16.mxu0 0
    %1540 = vmatmul.mubr.bf16.gmra.mrb[0].mxu0 %v556
    %v1541 = vpop.f32.mrb[0].mxu0
    %v1542 = vadd.f32 %v1445, %v1541
    %v1543 = vpop.f32.mrb[0].mxu0
    %v1544 = vpop.f32.mrb[0].mxu0
    %v1545 = vadd.f32 %v1448, %v1544
    %v1546 = vpop.f32.mrb[0].mxu0
    %1547 = vmatprep.mubr.bf16.mxu0 0
    %1548 = vmatmul.mubr.bf16.gmra.mrb[0].mxu0 %v565
    %v1549 = vpop.f32.mrb[0].mxu0
    %v1550 = vadd.f32 %v1453, %v1549
    %v1551 = vpop.f32.mrb[0].mxu0
    %v1552 = vpop.f32.mrb[0].mxu0
    %v1553 = vadd.f32 %v1456, %v1552
    %v1554 = vpop.f32.mrb[0].mxu0
    %1555 = vmatprep.mubr.bf16.mxu0 0
    %1556 = vmatmul.mubr.bf16.gmra.mrb[0].mxu0 %v574
    %v1557 = vpop.f32.mrb[0].mxu0
    %v1558 = vadd.f32 %v1461, %v1557
    %v1559 = vpop.f32.mrb[0].mxu0
    %v1560 = vpop.f32.mrb[0].mxu0
    %v1561 = vadd.f32 %v1464, %v1560
    %v1562 = vpop.f32.mrb[0].mxu0
    %1563 = vdwg.mxu0
    %v1564 = vadd.f32 %v39, %v1502
    %v1565 = vadd.f32 %v40, %v1505
    %v1566 = vadd.f32 %v41, %v1510
    %v1567 = vadd.f32 %v42, %v1513
    %v1568 = vadd.f32 %v43, %v1518
    %v1569 = vadd.f32 %v44, %v1521
    %v1570 = vadd.f32 %v45, %v1526
    %v1571 = vadd.f32 %v46, %v1529
    %v1572 = vadd.f32 %v47, %v1534
    %v1573 = vadd.f32 %v48, %v1537
    %v1574 = vadd.f32 %v49, %v1542
    %v1575 = vadd.f32 %v50, %v1545
    %v1576 = vadd.f32 %v51, %v1550
    %v1577 = vadd.f32 %v52, %v1553
    %v1578 = vadd.f32 %v53, %v1558
    %v1579 = vadd.f32 %v54, %v1561
    %1580 = vst [vmem:[#allocation2] sm:$0xff] %v1564
    %1581 = vst [vmem:[#allocation2 + $0x8] sm:$0xff] %v1565
    %1582 = vst [vmem:[#allocation2 + $0x10] sm:$0xff] %v1566
    %1583 = vst [vmem:[#allocation2 + $0x18] sm:$0xff] %v1567
    %1584 = vst [vmem:[#allocation2 + $0x20] sm:$0xff] %v1568
    %1585 = vst [vmem:[#allocation2 + $0x28] sm:$0xff] %v1569
    %1586 = vst [vmem:[#allocation2 + $0x30] sm:$0xff] %v1570
    %1587 = vst [vmem:[#allocation2 + $0x38] sm:$0xff] %v1571
    %1588 = vst [vmem:[#allocation2 + $0x40] sm:$0xff] %v1572
    %1589 = vst [vmem:[#allocation2 + $0x48] sm:$0xff] %v1573
    %1590 = vst [vmem:[#allocation2 + $0x50] sm:$0xff] %v1574
    %1591 = vst [vmem:[#allocation2 + $0x58] sm:$0xff] %v1575
    %1592 = vst [vmem:[#allocation2 + $0x60] sm:$0xff] %v1576
    %1593 = vst [vmem:[#allocation2 + $0x68] sm:$0xff] %v1577
    %1594 = vst [vmem:[#allocation2 + $0x70] sm:$0xff] %v1578
    %1595 = vst [vmem:[#allocation2 + $0x78] sm:$0xff] %v1579
    // Predicated region
    $region22: #{basic_block_forward.5} parent=1 // pred_check
      %p1596 = pneg %p19
    $region23: #{basic_block_forward.5} parent=1 // pred_check_branch
      %1598 = sbr.rel (%p1596) target = $region25
    $region24: #{basic_block_forward.5} parent=1 // pred_region
      %v1599 = vld [vmem:[#allocation2] sm:$0xff]
      %v1600 = vld [vmem:[#allocation2 + $0x8] sm:$0xff]
      %v1601 = vld [vmem:[#allocation2 + $0x10] sm:$0xff]
      %v1602 = vld [vmem:[#allocation2 + $0x18] sm:$0xff]
      %v1603 = vld [vmem:[#allocation2 + $0x20] sm:$0xff]
      %v1604 = vld [vmem:[#allocation2 + $0x28] sm:$0xff]
      %v1605 = vld [vmem:[#allocation2 + $0x30] sm:$0xff]
      %v1606 = vld [vmem:[#allocation2 + $0x38] sm:$0xff]
      %v1607 = vld [vmem:[#allocation2 + $0x40] sm:$0xff]
      %v1608 = vld [vmem:[#allocation2 + $0x48] sm:$0xff]
      %v1609 = vld [vmem:[#allocation2 + $0x50] sm:$0xff]
      %v1610 = vld [vmem:[#allocation2 + $0x58] sm:$0xff]
      %v1611 = vld [vmem:[#allocation2 + $0x60] sm:$0xff]
      %v1612 = vld [vmem:[#allocation2 + $0x68] sm:$0xff]
      %v1613 = vld [vmem:[#allocation2 + $0x70] sm:$0xff]
      %v1614 = vld [vmem:[#allocation2 + $0x78] sm:$0xff]
      %v1615 = vld [vmem:[%s2] sm:$0x1]
      %v1617 = vlaneseq
      %v1618 = vshrl.u32 %v1617, 7
      %v1619 = vsub.s32 0, %v1618
      %v1620 = vrot.slane %v1615, %v1619
      %v1622 = vadd.f32 %v1599, %v1620
      %v1623 = vadd.f32 %v1600, %v1620
      %v1624 = vadd.f32 %v1601, %v1620
      %v1625 = vadd.f32 %v1602, %v1620
      %v1626 = vadd.f32 %v1603, %v1620
      %v1627 = vadd.f32 %v1604, %v1620
      %v1628 = vadd.f32 %v1605, %v1620
      %v1629 = vadd.f32 %v1606, %v1620
      %v1630 = vadd.f32 %v1607, %v1620
      %v1631 = vadd.f32 %v1608, %v1620
      %v1632 = vadd.f32 %v1609, %v1620
      %v1633 = vadd.f32 %v1610, %v1620
      %v1634 = vadd.f32 %v1611, %v1620
      %v1635 = vadd.f32 %v1612, %v1620
      %v1636 = vadd.f32 %v1613, %v1620
      %v1637 = vadd.f32 %v1614, %v1620
      %v1638 = vld [vmem:[%s3] sm:$0xff]
      %v1639 = vld [vmem:[%s3 + $0x8] sm:$0xff]
      %v1640 = vld [vmem:[%s3 + $0x10] sm:$0xff]
      %v1641 = vld [vmem:[%s3 + $0x18] sm:$0xff]
      %v1642 = vld [vmem:[%s3 + $0x20] sm:$0xff]
      %v1643 = vld [vmem:[%s3 + $0x28] sm:$0xff]
      %v1644 = vld [vmem:[%s3 + $0x30] sm:$0xff]
      %v1645 = vld [vmem:[%s3 + $0x38] sm:$0xff]
      %v1646 = vld [vmem:[%s3 + $0x40] sm:$0xff]
      %v1647 = vld [vmem:[%s3 + $0x48] sm:$0xff]
      %v1648 = vld [vmem:[%s3 + $0x50] sm:$0xff]
      %v1649 = vld [vmem:[%s3 + $0x58] sm:$0xff]
      %v1650 = vld [vmem:[%s3 + $0x60] sm:$0xff]
      %v1651 = vld [vmem:[%s3 + $0x68] sm:$0xff]
      %v1652 = vld [vmem:[%s3 + $0x70] sm:$0xff]
      %v1653 = vld [vmem:[%s3 + $0x78] sm:$0xff]
      %v1654 = vadd.f32 %v1622, %v1638
      %v1655 = vadd.f32 %v1623, %v1639
      %v1656 = vadd.f32 %v1624, %v1640
      %v1657 = vadd.f32 %v1625, %v1641
      %v1658 = vadd.f32 %v1626, %v1642
      %v1659 = vadd.f32 %v1627, %v1643
      %v1660 = vadd.f32 %v1628, %v1644
      %v1661 = vadd.f32 %v1629, %v1645
      %v1662 = vadd.f32 %v1630, %v1646
      %v1663 = vadd.f32 %v1631, %v1647
      %v1664 = vadd.f32 %v1632, %v1648
      %v1665 = vadd.f32 %v1633, %v1649
      %v1666 = vadd.f32 %v1634, %v1650
      %v1667 = vadd.f32 %v1635, %v1651
      %v1668 = vadd.f32 %v1636, %v1652
      %v1669 = vadd.f32 %v1637, %v1653
      %v1670 = vmax.f32 %v1654, 0.0
      %v1671 = vmax.f32 %v1655, 0.0
      %v1672 = vmax.f32 %v1656, 0.0
      %v1673 = vmax.f32 %v1657, 0.0
      %v1674 = vmax.f32 %v1658, 0.0
      %v1675 = vmax.f32 %v1659, 0.0
      %v1676 = vmax.f32 %v1660, 0.0
      %v1677 = vmax.f32 %v1661, 0.0
      %v1678 = vmax.f32 %v1662, 0.0
      %v1679 = vmax.f32 %v1663, 0.0
      %v1680 = vmax.f32 %v1664, 0.0
      %v1681 = vmax.f32 %v1665, 0.0
      %v1682 = vmax.f32 %v1666, 0.0
      %v1683 = vmax.f32 %v1667, 0.0
      %v1684 = vmax.f32 %v1668, 0.0
      %v1685 = vmax.f32 %v1669, 0.0
      %1686 = vst [vmem:[#allocation3] sm:$0xff] %v1670
      %1687 = vst [vmem:[#allocation3 + $0x8] sm:$0xff] %v1671
      %1688 = vst [vmem:[#allocation3 + $0x10] sm:$0xff] %v1672
      %1689 = vst [vmem:[#allocation3 + $0x18] sm:$0xff] %v1673
      %1690 = vst [vmem:[#allocation3 + $0x20] sm:$0xff] %v1674
      %1691 = vst [vmem:[#allocation3 + $0x28] sm:$0xff] %v1675
      %1692 = vst [vmem:[#allocation3 + $0x30] sm:$0xff] %v1676
      %1693 = vst [vmem:[#allocation3 + $0x38] sm:$0xff] %v1677
      %1694 = vst [vmem:[#allocation3 + $0x40] sm:$0xff] %v1678
      %1695 = vst [vmem:[#allocation3 + $0x48] sm:$0xff] %v1679
      %1696 = vst [vmem:[#allocation3 + $0x50] sm:$0xff] %v1680
      %1697 = vst [vmem:[#allocation3 + $0x58] sm:$0xff] %v1681
      %1698 = vst [vmem:[#allocation3 + $0x60] sm:$0xff] %v1682
      %1699 = vst [vmem:[#allocation3 + $0x68] sm:$0xff] %v1683
      %1700 = vst [vmem:[#allocation3 + $0x70] sm:$0xff] %v1684
      %1701 = vst [vmem:[#allocation3 + $0x78] sm:$0xff] %v1685
    $region25: #{basic_block_forward.5} parent=1 // pred_fallthru
      _
    // Predicated region
    $region26: #{basic_block_forward.5} parent=1 // pred_check
      _
    $region27: #{basic_block_forward.5} parent=1 // pred_check_branch
      %1703 = sbr.rel (0) target = $region29
    $region28: #{basic_block_forward.5} parent=1 // pred_region
      %s1705 = ssub.s32 2048, 2048
      %1706 = vsyncadd [#allocation4], %s1705
      %s1707 = sshll.u32 [#allocation3], 4
      %s1708 = int_to_ptr.vmem [resolvable:$true] %s1707
      %1713 = dma.vmem_to_hbm [thread:$0]  %s1708, 2048, %s4, [#allocation4], 128, 128, 8
    $region29: #{basic_block_forward.5} parent=1 // pred_fallthru
      _
    // Predicated region
    $region30: #{basic_block_forward.5} parent=1 // pred_check
      _
    $region31: #{basic_block_forward.5} parent=1 // pred_check_branch
      %1715 = sbr.rel (0) target = $region33
    $region32: #{basic_block_forward.5} parent=1 // pred_region
      %1716 = dma.done [#allocation4], 2048
    $region33: #{basic_block_forward.5} parent=1 // pred_fallthru
      _
    %1717 = vsyncpa [#allocation4], 1

</llo_original>
